<compile_context>
chip_gen: v5e
topology: v5e:2x2
jax: 0.10.0
libtpu: 0.0.40
codegen_flags: <defaults>
</compile_context>

<pallas_src>
import jax
import jax.numpy as jnp
from jax.experimental import pallas as pl
from jax.experimental.pallas import tpu as pltpu

INPUT_SIZE = 100
NUM_CLASSES = 4096
EPS = 1e-5           # nn.BatchNorm1d default eps
NEG_SLOPE = 0.2      # LeakyReLU slope
TN = 1024            # output-column tile for the final (1024 x 4096) layer

# Packed layout of the small per-feature vectors (all offsets are multiples
# of 128, so in-kernel slices are lane-tile aligned).
_MISC_LAYOUT = {}
_off = 0
for _name, _width in (("b1", 128), ("b2", 256), ("b3", 512), ("b4", 1024),
                      ("g2", 256), ("g3", 512), ("g4", 1024),
                      ("be2", 256), ("be3", 512), ("be4", 1024)):
    _MISC_LAYOUT[_name] = (_off, _off + _width)
    _off += _width
MISC_LEN = _off  # 5504


def _misc(ref_or_arr, name):
    lo, hi = _MISC_LAYOUT[name]
    return ref_or_arr[:, lo:hi]


def _leaky_relu(h):
    return jnp.where(h > 0, h, NEG_SLOPE * h)


def _batchnorm_train(h, gamma, beta):
    # PyTorch BatchNorm1d in training mode: biased batch variance, eps=1e-5.
    mean = jnp.mean(h, axis=0, keepdims=True)
    var = jnp.mean((h - mean) * (h - mean), axis=0, keepdims=True)
    return gamma * (h - mean) * jax.lax.rsqrt(var + EPS) + beta


def _bf16_dot(h, w_ref):
    # bf16 x bf16 MXU matmul with f32 accumulation (native on v5e/v6e/v7x).
    return jnp.dot(h.astype(jnp.bfloat16), w_ref[...],
                   preferred_element_type=jnp.float32)


# --------------------------------------------------------------------------
# Stage 1: Linear1..Linear4 (+ BN + LeakyReLU).  Small weights, grid-less.
# BN statistics need the whole batch, so the full batch lives in this kernel.
# --------------------------------------------------------------------------
def stage1_kernel(x_ref, w1_ref, w2_ref, w3_ref, w4_ref, misc_ref, h4_ref):
    # Layer 1: Linear(100 -> 128, K zero-padded to 128) + LeakyReLU
    h = _bf16_dot(x_ref[...], w1_ref) + _misc(misc_ref, "b1")
    h = _leaky_relu(h)

    # Layer 2: Linear(128 -> 256) + BatchNorm1d + LeakyReLU
    h = _bf16_dot(h, w2_ref) + _misc(misc_ref, "b2")
    h = _leaky_relu(_batchnorm_train(h, _misc(misc_ref, "g2"),
                                     _misc(misc_ref, "be2")))

    # Layer 3: Linear(256 -> 512) + BatchNorm1d + LeakyReLU
    h = _bf16_dot(h, w3_ref) + _misc(misc_ref, "b3")
    h = _leaky_relu(_batchnorm_train(h, _misc(misc_ref, "g3"),
                                     _misc(misc_ref, "be3")))

    # Layer 4: Linear(512 -> 1024) + BatchNorm1d + LeakyReLU
    h = _bf16_dot(h, w4_ref) + _misc(misc_ref, "b4")
    h = _leaky_relu(_batchnorm_train(h, _misc(misc_ref, "g4"),
                                     _misc(misc_ref, "be4")))

    h4_ref[...] = h


# --------------------------------------------------------------------------
# Stage 2: Linear(1024 -> 4096) + Tanh, gridded over output columns so the
# dominant w5 stream is double-buffered and can be split across TensorCores.
# --------------------------------------------------------------------------
def stage2_kernel(h4_ref, w5_ref, b5_ref, out_ref):
    h = _bf16_dot(h4_ref[...], w5_ref) + b5_ref[...]
    out_ref[...] = jnp.tanh(h)


def init_params(key):
    """Deterministic synthetic parameters.

    PyTorch Linear weight (out,in) is stored transposed as (in,out); weights
    are kept in bfloat16 (halves the dominant HBM weight traffic).  The small
    per-feature vectors are packed into a single (1, 5504) f32 array.
    """
    # TODO(synk): per-target int8 (v5e/v6e) or fp8 (v7x) packing of w5 with
    # per-column scales would cut the dominant weight bytes a further 2x.
    dims = [INPUT_SIZE, 128, 256, 512, 1024, NUM_CLASSES]
    keys = jax.random.split(key, 16)
    ki = iter(range(16))
    raw = {}
    for li in range(5):
        fin, fout = dims[li], dims[li + 1]
        scale = 1.0 / jnp.sqrt(jnp.float32(fin))
        raw[f"w{li+1}"] = jax.random.uniform(
            keys[next(ki)], (fin, fout), jnp.float32, -scale, scale)
        raw[f"b{li+1}"] = jax.random.uniform(
            keys[next(ki)], (1, fout), jnp.float32, -scale, scale)
    for li, fout in ((2, 256), (3, 512), (4, 1024)):
        raw[f"g{li}"] = 1.0 + 0.1 * jax.random.normal(
            keys[next(ki)], (1, fout), jnp.float32)
        raw[f"be{li}"] = 0.1 * jax.random.normal(
            keys[next(ki)], (1, fout), jnp.float32)

    params = {}
    # Layer-1 weight zero-padded along K: 100 -> 128 (padding rows are 0).
    w1p = jnp.zeros((128, 128), jnp.float32).at[:INPUT_SIZE, :].set(raw["w1"])
    params["w1p"] = w1p.astype(jnp.bfloat16)
    for li in (2, 3, 4, 5):
        params[f"w{li}"] = raw[f"w{li}"].astype(jnp.bfloat16)
    params["b5"] = raw["b5"]
    params["misc"] = jnp.concatenate(
        [raw["b1"], raw["b2"], raw["b3"], raw["b4"],
         raw["g2"], raw["g3"], raw["g4"],
         raw["be2"], raw["be3"], raw["be4"]], axis=1)  # (1, MISC_LEN)
    return params


def generator_forward(x, params):
    """x: (B, 100) float32 -> (B, 1, 64, 64) float32 (NCHW)."""
    B = x.shape[0]
    x_pad = jnp.pad(x, ((0, 0), (0, 128 - INPUT_SIZE)))  # K padded to 128

    vmem = pl.BlockSpec(memory_space=pltpu.MemorySpace.VMEM)

    # Stage 1: small weights, whole-array in VMEM, BN over the full batch.
    h4 = pl.pallas_call(
        stage1_kernel,
        out_shape=jax.ShapeDtypeStruct((B, 1024), jnp.float32),
        in_specs=[vmem] * 6,
        out_specs=vmem,
        compiler_params=pltpu.CompilerParams(vmem_limit_bytes=32 << 20),
    )(x_pad, params["w1p"], params["w2"], params["w3"], params["w4"],
      params["misc"])

    # Stage 2: grid over the 4096 output columns (double-buffered w5 stream;
    # "parallel" lets the two v7x TensorCores each take half the tiles).
    y = pl.pallas_call(
        stage2_kernel,
        out_shape=jax.ShapeDtypeStruct((B, NUM_CLASSES), jnp.float32),
        grid_spec=pltpu.PrefetchScalarGridSpec(
            num_scalar_prefetch=0,
            grid=(NUM_CLASSES // TN,),
            in_specs=[pl.BlockSpec((B, 1024), lambda j: (0, 0)),   # h4 resident
                      pl.BlockSpec((1024, TN), lambda j: (0, j)),  # w5 tile
                      pl.BlockSpec((1, TN), lambda j: (0, j))],    # b5 tile
            out_specs=pl.BlockSpec((B, TN), lambda j: (0, j)),
        ),
        compiler_params=pltpu.CompilerParams(
            dimension_semantics=("parallel",),
            vmem_limit_bytes=32 << 20),
    )(h4, params["w5"], params["b5"])

    # Glue: PyTorch `y_.view(B, 1, 64, 64)` (NCHW).
    return y.reshape(B, 1, 64, 64)


def generator_reference(x, params):
    """Pure-JAX reference mirroring the kernel math exactly (bf16 weights,
    bf16 activations into the MXU, f32 accumulation, training-mode BN)."""
    x_pad = jnp.pad(x, ((0, 0), (0, 128 - INPUT_SIZE)))
    misc = params["misc"]

    def dot(h, w):
        return jnp.dot(h.astype(jnp.bfloat16), w,
                       preferred_element_type=jnp.float32)

    h = _leaky_relu(dot(x_pad, params["w1p"]) + _misc(misc, "b1"))
    for li in (2, 3, 4):
        h = dot(h, params[f"w{li}"]) + _misc(misc, f"b{li}")
        h = _leaky_relu(_batchnorm_train(h, _misc(misc, f"g{li}"),
                                         _misc(misc, f"be{li}")))
    h = dot(h, params["w5"]) + params["b5"]
    return jnp.tanh(h).reshape(x.shape[0], 1, 64, 64)


if __name__ == "__main__":
    key = jax.random.PRNGKey(0)
    k_param, k_x = jax.random.split(key)
    params = init_params(k_param)

    B = 8  # BatchNorm1d (training mode) needs B > 1; 8 = one sublane tile
    x = jax.random.normal(k_x, (B, INPUT_SIZE), jnp.float32)

    y = generator_forward(x, params)
    y = jax.block_until_ready(y)

    y_ref = generator_reference(x, params)
    assert y.shape == (B, 1, 64, 64)
    assert jnp.allclose(y, y_ref, atol=1e-2, rtol=1e-2), (
        float(jnp.max(jnp.abs(y - y_ref))))

    print("KERNEL_OK")
</pallas_src>

<mosaic_0001>
module attributes {stable_mosaic.version = 11 : i64} {
  func.func @stage1_kernel(%arg0: memref<8x128xf32, #tpu.memory_space<vmem>>, %arg1: memref<128x128xbf16, #tpu.memory_space<vmem>>, %arg2: memref<128x256xbf16, #tpu.memory_space<vmem>>, %arg3: memref<256x512xbf16, #tpu.memory_space<vmem>>, %arg4: memref<512x1024xbf16, #tpu.memory_space<vmem>>, %arg5: memref<1x5504xf32, #tpu.memory_space<vmem>>, %arg6: memref<8x1024xf32, #tpu.memory_space<vmem>>) attributes {dimension_semantics = [], scalar_prefetch = 0 : i64, scratch_operands = 0 : i64, tpu.core_type = #tpu.core_type<tc>} {
    %c0 = arith.constant 0 : index
    %c0_0 = arith.constant 0 : index
    %0 = vector.load %arg0[%c0, %c0_0] : memref<8x128xf32, #tpu.memory_space<vmem>>, vector<8x128xf32>
    %1 = arith.truncf %0 : vector<8x128xf32> to vector<8x128xbf16>
    %c0_1 = arith.constant 0 : index
    %c0_2 = arith.constant 0 : index
    %2 = vector.load %arg1[%c0_1, %c0_2] : memref<128x128xbf16, #tpu.memory_space<vmem>>, vector<128x128xbf16>
    %cst = arith.constant dense<0.000000e+00> : vector<8x128xf32>
    %3 = tpu.matmul %1, %2, %cst {dimension_numbers = #tpu.dot_dimension_numbers<[1], [0], [0], [1], [0, 0, 1, 1], [], []>} : vector<8x128xbf16>, vector<128x128xbf16>, vector<8x128xf32> -> vector<8x128xf32>
    %c0_3 = arith.constant 0 : index
    %c0_4 = arith.constant 0 : index
    %4 = vector.load %arg5[%c0_3, %c0_4] : memref<1x5504xf32, #tpu.memory_space<vmem>>, vector<1x128xf32>
    %5 = vector.broadcast %4 : vector<1x128xf32> to vector<8x128xf32>
    %6 = arith.addf %3, %5 : vector<8x128xf32>
    %cst_5 = arith.constant 0.000000e+00 : f32
    %7 = vector.broadcast %cst_5 : f32 to vector<8x128xf32>
    %8 = arith.cmpf ogt, %6, %7 : vector<8x128xf32>
    %cst_6 = arith.constant 2.000000e-01 : f32
    %9 = vector.broadcast %cst_6 : f32 to vector<8x128xf32>
    %10 = arith.mulf %9, %6 : vector<8x128xf32>
    %11 = arith.select %8, %6, %10 : vector<8x128xi1>, vector<8x128xf32>
    %12 = arith.truncf %11 : vector<8x128xf32> to vector<8x128xbf16>
    %c0_7 = arith.constant 0 : index
    %c0_8 = arith.constant 0 : index
    %13 = vector.load %arg2[%c0_7, %c0_8] : memref<128x256xbf16, #tpu.memory_space<vmem>>, vector<128x256xbf16>
    %cst_9 = arith.constant dense<0.000000e+00> : vector<8x256xf32>
    %14 = tpu.matmul %12, %13, %cst_9 {dimension_numbers = #tpu.dot_dimension_numbers<[1], [0], [0], [1], [0, 0, 1, 1], [], []>} : vector<8x128xbf16>, vector<128x256xbf16>, vector<8x256xf32> -> vector<8x256xf32>
    %c0_10 = arith.constant 0 : index
    %c128 = arith.constant 128 : index
    %15 = vector.load %arg5[%c0_10, %c128] : memref<1x5504xf32, #tpu.memory_space<vmem>>, vector<1x256xf32>
    %16 = vector.broadcast %15 : vector<1x256xf32> to vector<8x256xf32>
    %17 = arith.addf %14, %16 : vector<8x256xf32>
    %c0_11 = arith.constant 0 : index
    %c1920 = arith.constant 1920 : index
    %18 = vector.load %arg5[%c0_11, %c1920] : memref<1x5504xf32, #tpu.memory_space<vmem>>, vector<1x256xf32>
    %c0_12 = arith.constant 0 : index
    %c3712 = arith.constant 3712 : index
    %19 = vector.load %arg5[%c0_12, %c3712] : memref<1x5504xf32, #tpu.memory_space<vmem>>, vector<1x256xf32>
    %cst_13 = arith.constant dense<0.000000e+00> : vector<256xf32>
    %20 = vector.multi_reduction <add>, %17, %cst_13 [0] : vector<8x256xf32> to vector<256xf32>
    %21 = vector.shape_cast %20 : vector<256xf32> to vector<1x256xf32>
    %cst_14 = arith.constant 8.000000e+00 : f32
    %22 = vector.broadcast %cst_14 : f32 to vector<1x256xf32>
    %23 = arith.divf %21, %22 : vector<1x256xf32>
    %24 = vector.broadcast %23 : vector<1x256xf32> to vector<8x256xf32>
    %25 = arith.subf %17, %24 : vector<8x256xf32>
    %26 = vector.broadcast %23 : vector<1x256xf32> to vector<8x256xf32>
    %27 = arith.subf %17, %26 : vector<8x256xf32>
    %28 = arith.mulf %25, %27 : vector<8x256xf32>
    %cst_15 = arith.constant dense<0.000000e+00> : vector<256xf32>
    %29 = vector.multi_reduction <add>, %28, %cst_15 [0] : vector<8x256xf32> to vector<256xf32>
    %30 = vector.shape_cast %29 : vector<256xf32> to vector<1x256xf32>
    %cst_16 = arith.constant 8.000000e+00 : f32
    %31 = vector.broadcast %cst_16 : f32 to vector<1x256xf32>
    %32 = arith.divf %30, %31 : vector<1x256xf32>
    %33 = vector.broadcast %23 : vector<1x256xf32> to vector<8x256xf32>
    %34 = arith.subf %17, %33 : vector<8x256xf32>
    %35 = vector.broadcast %18 : vector<1x256xf32> to vector<8x256xf32>
    %36 = arith.mulf %35, %34 : vector<8x256xf32>
    %cst_17 = arith.constant 9.99999974E-6 : f32
    %37 = vector.broadcast %cst_17 : f32 to vector<1x256xf32>
    %38 = arith.addf %32, %37 : vector<1x256xf32>
    %39 = math.rsqrt %38 : vector<1x256xf32>
    %40 = vector.broadcast %39 : vector<1x256xf32> to vector<8x256xf32>
    %41 = arith.mulf %36, %40 : vector<8x256xf32>
    %42 = vector.broadcast %19 : vector<1x256xf32> to vector<8x256xf32>
    %43 = arith.addf %41, %42 : vector<8x256xf32>
    %cst_18 = arith.constant 0.000000e+00 : f32
    %44 = vector.broadcast %cst_18 : f32 to vector<8x256xf32>
    %45 = arith.cmpf ogt, %43, %44 : vector<8x256xf32>
    %cst_19 = arith.constant 2.000000e-01 : f32
    %46 = vector.broadcast %cst_19 : f32 to vector<8x256xf32>
    %47 = arith.mulf %46, %43 : vector<8x256xf32>
    %48 = arith.select %45, %43, %47 : vector<8x256xi1>, vector<8x256xf32>
    %49 = arith.truncf %48 : vector<8x256xf32> to vector<8x256xbf16>
    %c0_20 = arith.constant 0 : index
    %c0_21 = arith.constant 0 : index
    %50 = vector.load %arg3[%c0_20, %c0_21] : memref<256x512xbf16, #tpu.memory_space<vmem>>, vector<256x512xbf16>
    %cst_22 = arith.constant dense<0.000000e+00> : vector<8x512xf32>
    %51 = tpu.matmul %49, %50, %cst_22 {dimension_numbers = #tpu.dot_dimension_numbers<[1], [0], [0], [1], [0, 0, 1, 1], [], []>} : vector<8x256xbf16>, vector<256x512xbf16>, vector<8x512xf32> -> vector<8x512xf32>
    %c0_23 = arith.constant 0 : index
    %c384 = arith.constant 384 : index
    %52 = vector.load %arg5[%c0_23, %c384] : memref<1x5504xf32, #tpu.memory_space<vmem>>, vector<1x512xf32>
    %53 = vector.broadcast %52 : vector<1x512xf32> to vector<8x512xf32>
    %54 = arith.addf %51, %53 : vector<8x512xf32>
    %c0_24 = arith.constant 0 : index
    %c2176 = arith.constant 2176 : index
    %55 = vector.load %arg5[%c0_24, %c2176] : memref<1x5504xf32, #tpu.memory_space<vmem>>, vector<1x512xf32>
    %c0_25 = arith.constant 0 : index
    %c3968 = arith.constant 3968 : index
    %56 = vector.load %arg5[%c0_25, %c3968] : memref<1x5504xf32, #tpu.memory_space<vmem>>, vector<1x512xf32>
    %cst_26 = arith.constant dense<0.000000e+00> : vector<512xf32>
    %57 = vector.multi_reduction <add>, %54, %cst_26 [0] : vector<8x512xf32> to vector<512xf32>
    %58 = vector.shape_cast %57 : vector<512xf32> to vector<1x512xf32>
    %cst_27 = arith.constant 8.000000e+00 : f32
    %59 = vector.broadcast %cst_27 : f32 to vector<1x512xf32>
    %60 = arith.divf %58, %59 : vector<1x512xf32>
    %61 = vector.broadcast %60 : vector<1x512xf32> to vector<8x512xf32>
    %62 = arith.subf %54, %61 : vector<8x512xf32>
    %63 = vector.broadcast %60 : vector<1x512xf32> to vector<8x512xf32>
    %64 = arith.subf %54, %63 : vector<8x512xf32>
    %65 = arith.mulf %62, %64 : vector<8x512xf32>
    %cst_28 = arith.constant dense<0.000000e+00> : vector<512xf32>
    %66 = vector.multi_reduction <add>, %65, %cst_28 [0] : vector<8x512xf32> to vector<512xf32>
    %67 = vector.shape_cast %66 : vector<512xf32> to vector<1x512xf32>
    %cst_29 = arith.constant 8.000000e+00 : f32
    %68 = vector.broadcast %cst_29 : f32 to vector<1x512xf32>
    %69 = arith.divf %67, %68 : vector<1x512xf32>
    %70 = vector.broadcast %60 : vector<1x512xf32> to vector<8x512xf32>
    %71 = arith.subf %54, %70 : vector<8x512xf32>
    %72 = vector.broadcast %55 : vector<1x512xf32> to vector<8x512xf32>
    %73 = arith.mulf %72, %71 : vector<8x512xf32>
    %cst_30 = arith.constant 9.99999974E-6 : f32
    %74 = vector.broadcast %cst_30 : f32 to vector<1x512xf32>
    %75 = arith.addf %69, %74 : vector<1x512xf32>
    %76 = math.rsqrt %75 : vector<1x512xf32>
    %77 = vector.broadcast %76 : vector<1x512xf32> to vector<8x512xf32>
    %78 = arith.mulf %73, %77 : vector<8x512xf32>
    %79 = vector.broadcast %56 : vector<1x512xf32> to vector<8x512xf32>
    %80 = arith.addf %78, %79 : vector<8x512xf32>
    %cst_31 = arith.constant 0.000000e+00 : f32
    %81 = vector.broadcast %cst_31 : f32 to vector<8x512xf32>
    %82 = arith.cmpf ogt, %80, %81 : vector<8x512xf32>
    %cst_32 = arith.constant 2.000000e-01 : f32
    %83 = vector.broadcast %cst_32 : f32 to vector<8x512xf32>
    %84 = arith.mulf %83, %80 : vector<8x512xf32>
    %85 = arith.select %82, %80, %84 : vector<8x512xi1>, vector<8x512xf32>
    %86 = arith.truncf %85 : vector<8x512xf32> to vector<8x512xbf16>
    %c0_33 = arith.constant 0 : index
    %c0_34 = arith.constant 0 : index
    %87 = vector.load %arg4[%c0_33, %c0_34] : memref<512x1024xbf16, #tpu.memory_space<vmem>>, vector<512x1024xbf16>
    %cst_35 = arith.constant dense<0.000000e+00> : vector<8x1024xf32>
    %88 = tpu.matmul %86, %87, %cst_35 {dimension_numbers = #tpu.dot_dimension_numbers<[1], [0], [0], [1], [0, 0, 1, 1], [], []>} : vector<8x512xbf16>, vector<512x1024xbf16>, vector<8x1024xf32> -> vector<8x1024xf32>
    %c0_36 = arith.constant 0 : index
    %c896 = arith.constant 896 : index
    %89 = vector.load %arg5[%c0_36, %c896] : memref<1x5504xf32, #tpu.memory_space<vmem>>, vector<1x1024xf32>
    %90 = vector.broadcast %89 : vector<1x1024xf32> to vector<8x1024xf32>
    %91 = arith.addf %88, %90 : vector<8x1024xf32>
    %c0_37 = arith.constant 0 : index
    %c2688 = arith.constant 2688 : index
    %92 = vector.load %arg5[%c0_37, %c2688] : memref<1x5504xf32, #tpu.memory_space<vmem>>, vector<1x1024xf32>
    %c0_38 = arith.constant 0 : index
    %c4480 = arith.constant 4480 : index
    %93 = vector.load %arg5[%c0_38, %c4480] : memref<1x5504xf32, #tpu.memory_space<vmem>>, vector<1x1024xf32>
    %cst_39 = arith.constant dense<0.000000e+00> : vector<1024xf32>
    %94 = vector.multi_reduction <add>, %91, %cst_39 [0] : vector<8x1024xf32> to vector<1024xf32>
    %95 = vector.shape_cast %94 : vector<1024xf32> to vector<1x1024xf32>
    %cst_40 = arith.constant 8.000000e+00 : f32
    %96 = vector.broadcast %cst_40 : f32 to vector<1x1024xf32>
    %97 = arith.divf %95, %96 : vector<1x1024xf32>
    %98 = vector.broadcast %97 : vector<1x1024xf32> to vector<8x1024xf32>
    %99 = arith.subf %91, %98 : vector<8x1024xf32>
    %100 = vector.broadcast %97 : vector<1x1024xf32> to vector<8x1024xf32>
    %101 = arith.subf %91, %100 : vector<8x1024xf32>
    %102 = arith.mulf %99, %101 : vector<8x1024xf32>
    %cst_41 = arith.constant dense<0.000000e+00> : vector<1024xf32>
    %103 = vector.multi_reduction <add>, %102, %cst_41 [0] : vector<8x1024xf32> to vector<1024xf32>
    %104 = vector.shape_cast %103 : vector<1024xf32> to vector<1x1024xf32>
    %cst_42 = arith.constant 8.000000e+00 : f32
    %105 = vector.broadcast %cst_42 : f32 to vector<1x1024xf32>
    %106 = arith.divf %104, %105 : vector<1x1024xf32>
    %107 = vector.broadcast %97 : vector<1x1024xf32> to vector<8x1024xf32>
    %108 = arith.subf %91, %107 : vector<8x1024xf32>
    %109 = vector.broadcast %92 : vector<1x1024xf32> to vector<8x1024xf32>
    %110 = arith.mulf %109, %108 : vector<8x1024xf32>
    %cst_43 = arith.constant 9.99999974E-6 : f32
    %111 = vector.broadcast %cst_43 : f32 to vector<1x1024xf32>
    %112 = arith.addf %106, %111 : vector<1x1024xf32>
    %113 = math.rsqrt %112 : vector<1x1024xf32>
    %114 = vector.broadcast %113 : vector<1x1024xf32> to vector<8x1024xf32>
    %115 = arith.mulf %110, %114 : vector<8x1024xf32>
    %116 = vector.broadcast %93 : vector<1x1024xf32> to vector<8x1024xf32>
    %117 = arith.addf %115, %116 : vector<8x1024xf32>
    %cst_44 = arith.constant 0.000000e+00 : f32
    %118 = vector.broadcast %cst_44 : f32 to vector<8x1024xf32>
    %119 = arith.cmpf ogt, %117, %118 : vector<8x1024xf32>
    %cst_45 = arith.constant 2.000000e-01 : f32
    %120 = vector.broadcast %cst_45 : f32 to vector<8x1024xf32>
    %121 = arith.mulf %120, %117 : vector<8x1024xf32>
    %122 = arith.select %119, %117, %121 : vector<8x1024xi1>, vector<8x1024xf32>
    %c0_46 = arith.constant 0 : index
    %c0_47 = arith.constant 0 : index
    %123 = vector.load %arg6[%c0_46, %c0_47] : memref<8x1024xf32, #tpu.memory_space<vmem>>, vector<8x1024xf32>
    tpu.vector_store %arg6[%c0_46, %c0_47], %122 {strides = array<i32>} : memref<8x1024xf32, #tpu.memory_space<vmem>>, vector<8x1024xf32>,
    return
  }
}

</mosaic_0001>

<llo_original>
// kernel: tpu_custom_call.1
$region0: #{tpu_custom_call.1}
  #allocation0 [shape = 'u32[]', space=smem, size = 0x4, offset = 0x4, fixed_abs, tag = 'smem constant byte address 0x4 - core index']
  #allocation1 [shape = 'u32[72,128]{1,0:T(1,128)}', space=vmem, size = 0x9000, scoped, tag = 'internal scratch']
  %s0 = inlined_call_operand.hbm [shape: f32[8,128], index: 0, kind: input, shape index: {}]
  %s1 = inlined_call_operand.hbm [shape: bf16[128,128], index: 1, kind: input, shape index: {}]
  %s2 = inlined_call_operand.hbm [shape: bf16[128,256], index: 2, kind: input, shape index: {}]
  %s3 = inlined_call_operand.hbm [shape: bf16[256,512], index: 3, kind: input, shape index: {}]
  %s4 = inlined_call_operand.hbm [shape: bf16[512,1024], index: 4, kind: input, shape index: {}]
  %s5 = inlined_call_operand.hbm [shape: f32[1,5504], index: 5, kind: input, shape index: {}]
  %s6 = inlined_call_operand.hbm [shape: f32[8,1024], index: 6, kind: output, shape index: {}]
  %s7 = sld [smem:[#allocation0]]
  $region58: #{tpu_custom_call.1} parent=0
    _
  %s9 = ssub.s32 1, %s7
  %s10 = scalar_select 0, %s9, %s7
  $region1: #{tpu_custom_call.1} parent=0
    #allocation2 [shape = 'u8[4096]{0}', space=vmem, size = 0x1000, scoped, tag = 'input window, operand 0, single buffered']
    #allocation3 [shape = 's32[1]{0}', space=sflag, size = 0x4, scoped, tag = 'scoped memory for tpu_custom_call.1']
    #allocation4 [shape = 's32[1]{0}', space=sflag, size = 0x4, scoped, tag = 'scoped memory for tpu_custom_call.1']
    #allocation5 [shape = 'u8[32768]{0}', space=vmem, size = 0x8000, scoped, tag = 'input window, operand 1, single buffered']
    #allocation6 [shape = 's32[1]{0}', space=sflag, size = 0x4, scoped, tag = 'scoped memory for tpu_custom_call.1']
    #allocation7 [shape = 'u8[65536]{0}', space=vmem, size = 0x10000, scoped, tag = 'input window, operand 2, single buffered']
    #allocation8 [shape = 'u8[262144]{0}', space=vmem, size = 0x40000, scoped, tag = 'input window, operand 3, single buffered']
    #allocation9 [shape = 's32[1]{0}', space=sflag, size = 0x4, scoped, tag = 'scoped memory for tpu_custom_call.1']
    #allocation10 [shape = 'u8[1048576]{0}', space=vmem, size = 0x100000, scoped, tag = 'input window, operand 4, single buffered']
    #allocation11 [shape = 'u8[22016]{0}', space=vmem, size = 0x5800, scoped, tag = 'input window, operand 5, single buffered']
    #allocation12 [shape = 's32[1]{0}', space=sflag, size = 0x4, scoped, tag = 'scoped memory for tpu_custom_call.1']
    #allocation13 [shape = 'u8[32768]{0}', space=vmem, size = 0x8000, scoped, tag = 'output window, operand 0, single buffered']
    %11 = vsyncpa [#allocation3], 0
    %12 = vsyncpa [#allocation6], 0
    %13 = vsyncpa [#allocation9], 0
    %14 = vsyncpa [#allocation12], 0
    %15 = vsyncpa [#allocation4], 0
    // Predicated region
    $region2: #{tpu_custom_call.1} parent=1 // pred_check
      _
    $region3: #{tpu_custom_call.1} parent=1 // pred_check_branch
      %17 = sbr.rel (0) target = $region5
    $region4: #{tpu_custom_call.1} parent=1 // pred_region
      %19 = vsyncadd [#allocation3], 0
      %s21 = sshll.u32 %s0, 4
      %s22 = int_to_ptr.hbm [resolvable:$true] %s21
      %s23 = sshll.u32 [#allocation2], 4
      %s24 = int_to_ptr.vmem [resolvable:$true] %s23
      %26 = dma.hbm_to_vmem [thread:$0]  %s22, 128, %s24, [#allocation3]
    $region5: #{tpu_custom_call.1} parent=1 // pred_fallthru
      _
    // Predicated region
    $region6: #{tpu_custom_call.1} parent=1 // pred_check
      _
    $region7: #{tpu_custom_call.1} parent=1 // pred_check_branch
      %28 = sbr.rel (0) target = $region9
    $region8: #{tpu_custom_call.1} parent=1 // pred_region
      %30 = vsyncadd [#allocation6], 0
      %s31 = sshll.u32 %s1, 4
      %s32 = int_to_ptr.hbm [resolvable:$true] %s31
      %s33 = sshll.u32 [#allocation5], 4
      %s34 = int_to_ptr.vmem [resolvable:$true] %s33
      %39 = dma.hbm_to_vmem [thread:$0]  %s32, 1024, %s34, [#allocation6], 64, 64, 4
    $region9: #{tpu_custom_call.1} parent=1 // pred_fallthru
      _
    // Predicated region
    $region10: #{tpu_custom_call.1} parent=1 // pred_check
      _
    $region11: #{tpu_custom_call.1} parent=1 // pred_check_branch
      %41 = sbr.rel (0) target = $region13
    $region12: #{tpu_custom_call.1} parent=1 // pred_region
      %43 = vsyncadd [#allocation6], 0
      %s44 = sshll.u32 %s2, 4
      %s45 = int_to_ptr.hbm [resolvable:$true] %s44
      %s46 = sshll.u32 [#allocation7], 4
      %s47 = int_to_ptr.vmem [resolvable:$true] %s46
      %52 = dma.hbm_to_vmem [thread:$0]  %s45, 2048, %s47, [#allocation6], 128, 128, 8
    $region13: #{tpu_custom_call.1} parent=1 // pred_fallthru
      _
    // Predicated region
    $region14: #{tpu_custom_call.1} parent=1 // pred_check
      _
    $region15: #{tpu_custom_call.1} parent=1 // pred_check_branch
      %54 = sbr.rel (0) target = $region17
    $region16: #{tpu_custom_call.1} parent=1 // pred_region
      %56 = vsyncadd [#allocation9], 0
      %s57 = sshll.u32 %s3, 4
      %s58 = int_to_ptr.hbm [resolvable:$true] %s57
      %s59 = sshll.u32 [#allocation8], 4
      %s60 = int_to_ptr.vmem [resolvable:$true] %s59
      %65 = dma.hbm_to_vmem [thread:$0]  %s58, 8192, %s60, [#allocation9], 256, 256, 16
    $region17: #{tpu_custom_call.1} parent=1 // pred_fallthru
      _
    // Predicated region
    $region18: #{tpu_custom_call.1} parent=1 // pred_check
      _
    $region19: #{tpu_custom_call.1} parent=1 // pred_check_branch
      %67 = sbr.rel (0) target = $region21
    $region20: #{tpu_custom_call.1} parent=1 // pred_region
      %69 = vsyncadd [#allocation9], 0
      %s70 = sshll.u32 %s4, 4
      %s71 = int_to_ptr.hbm [resolvable:$true] %s70
      %s72 = sshll.u32 [#allocation10], 4
      %s73 = int_to_ptr.vmem [resolvable:$true] %s72
      %78 = dma.hbm_to_vmem [thread:$0]  %s71, 32768, %s73, [#allocation9], 512, 512, 32
    $region21: #{tpu_custom_call.1} parent=1 // pred_fallthru
      _
    // Predicated region
    $region22: #{tpu_custom_call.1} parent=1 // pred_check
      _
    $region23: #{tpu_custom_call.1} parent=1 // pred_check_branch
      %80 = sbr.rel (0) target = $region25
    $region24: #{tpu_custom_call.1} parent=1 // pred_region
      %82 = vsyncadd [#allocation12], 0
      %s84 = sshll.u32 %s5, 4
      %s85 = int_to_ptr.hbm [resolvable:$true] %s84
      %s86 = sshll.u32 [#allocation11], 4
      %s87 = int_to_ptr.vmem [resolvable:$true] %s86
      %89 = dma.hbm_to_vmem [thread:$0]  %s85, 688, %s87, [#allocation12]
    $region25: #{tpu_custom_call.1} parent=1 // pred_fallthru
      _
    // Predicated region
    $region26: #{tpu_custom_call.1} parent=1 // pred_check
      _
    $region27: #{tpu_custom_call.1} parent=1 // pred_check_branch
      %91 = sbr.rel (0) target = $region29
    $region28: #{tpu_custom_call.1} parent=1 // pred_region
      %93 = dma.done [#allocation3], 128
    $region29: #{tpu_custom_call.1} parent=1 // pred_fallthru
      _
    // Predicated region
    $region30: #{tpu_custom_call.1} parent=1 // pred_check
      _
    $region31: #{tpu_custom_call.1} parent=1 // pred_check_branch
      %95 = sbr.rel (0) target = $region33
    $region32: #{tpu_custom_call.1} parent=1 // pred_region
      %97 = dma.done [#allocation6], 1024
    $region33: #{tpu_custom_call.1} parent=1 // pred_fallthru
      _
    // Predicated region
    $region34: #{tpu_custom_call.1} parent=1 // pred_check
      _
    $region35: #{tpu_custom_call.1} parent=1 // pred_check_branch
      %99 = sbr.rel (0) target = $region37
    $region36: #{tpu_custom_call.1} parent=1 // pred_region
      %101 = dma.done [#allocation6], 2048
    $region37: #{tpu_custom_call.1} parent=1 // pred_fallthru
      _
    // Predicated region
    $region38: #{tpu_custom_call.1} parent=1 // pred_check
      _
    $region39: #{tpu_custom_call.1} parent=1 // pred_check_branch
      %103 = sbr.rel (0) target = $region41
    $region40: #{tpu_custom_call.1} parent=1 // pred_region
      %105 = dma.done [#allocation9], 8192
    $region41: #{tpu_custom_call.1} parent=1 // pred_fallthru
      _
    // Predicated region
    $region42: #{tpu_custom_call.1} parent=1 // pred_check
      _
    $region43: #{tpu_custom_call.1} parent=1 // pred_check_branch
      %107 = sbr.rel (0) target = $region45
    $region44: #{tpu_custom_call.1} parent=1 // pred_region
      %109 = dma.done [#allocation9], 32768
    $region45: #{tpu_custom_call.1} parent=1 // pred_fallthru
      _
    // Predicated region
    $region46: #{tpu_custom_call.1} parent=1 // pred_check
      _
    $region47: #{tpu_custom_call.1} parent=1 // pred_check_branch
      %111 = sbr.rel (0) target = $region49
    $region48: #{tpu_custom_call.1} parent=1 // pred_region
      %113 = dma.done [#allocation12], 688
    $region49: #{tpu_custom_call.1} parent=1 // pred_fallthru
      _
    %v114 = vld [vmem:[#allocation2] sm:$0xff]
    %v115 = vpack.c.bf16 %v114, %v114
    %v116 = vld [vmem:[#allocation5] sm:$0xf]
    %v117 = vld [vmem:[#allocation5 + $0x4] sm:$0xf]
    %v118 = vld [vmem:[#allocation5 + $0x8] sm:$0xf]
    %v119 = vld [vmem:[#allocation5 + $0xc] sm:$0xf]
    %v120 = vld [vmem:[#allocation5 + $0x10] sm:$0xf]
    %v121 = vld [vmem:[#allocation5 + $0x14] sm:$0xf]
    %v122 = vld [vmem:[#allocation5 + $0x18] sm:$0xf]
    %v123 = vld [vmem:[#allocation5 + $0x1c] sm:$0xf]
    %v124 = vld [vmem:[#allocation5 + $0x20] sm:$0xf]
    %v125 = vld [vmem:[#allocation5 + $0x24] sm:$0xf]
    %v126 = vld [vmem:[#allocation5 + $0x28] sm:$0xf]
    %v127 = vld [vmem:[#allocation5 + $0x2c] sm:$0xf]
    %v128 = vld [vmem:[#allocation5 + $0x30] sm:$0xf]
    %v129 = vld [vmem:[#allocation5 + $0x34] sm:$0xf]
    %v130 = vld [vmem:[#allocation5 + $0x38] sm:$0xf]
    %v131 = vld [vmem:[#allocation5 + $0x3c] sm:$0xf]
    %v132 = vld [vmem:[#allocation11] sm:$0x1]
    %v134 = vperm.slane %v132, 0
    %v152 = vunpack.c.l.b16 %v116
    %v153 = vunpack.c.l.b16 %v117
    %v154 = vunpack.c.l.b16 %v118
    %v155 = vunpack.c.l.b16 %v119
    %v156 = vunpack.c.l.b16 %v120
    %v157 = vunpack.c.l.b16 %v121
    %v158 = vunpack.c.l.b16 %v122
    %v159 = vunpack.c.l.b16 %v123
    %v160 = vunpack.c.l.b16 %v124
    %v161 = vunpack.c.l.b16 %v125
    %v162 = vunpack.c.l.b16 %v126
    %v163 = vunpack.c.l.b16 %v127
    %v164 = vunpack.c.l.b16 %v128
    %v165 = vunpack.c.l.b16 %v129
    %v166 = vunpack.c.l.b16 %v130
    %v167 = vunpack.c.l.b16 %v131
    %v168 = vpack.c.b16 %v153, %v152
    %v169 = vpack.c.b16 %v155, %v154
    %v170 = vpack.c.b16 %v157, %v156
    %v171 = vpack.c.b16 %v159, %v158
    %v172 = vpack.c.b16 %v161, %v160
    %v173 = vpack.c.b16 %v163, %v162
    %v174 = vpack.c.b16 %v165, %v164
    %v175 = vpack.c.b16 %v167, %v166
    %184 = vmatpush.bf16.msra.mxu0 %v175
    %185 = vmatpush.bf16.msra.mxu0 %v174
    %186 = vmatpush.bf16.msra.mxu0 %v173
    %187 = vmatpush.bf16.msra.mxu0 %v172
    %188 = vmatpush.bf16.msra.mxu0 %v171
    %189 = vmatpush.bf16.msra.mxu0 %v170
    %190 = vmatpush.bf16.msra.mxu0 %v169
    %191 = vmatpush.bf16.msra.mxu0 %v168
    %192 = vmatmul.bf16.gmra.mxu0 %v115
    %v193 = vpop.f32.mrf.mxu0
    %v194 = vadd.f32 %v134, %v193
    %v195 = vpop.f32.mrf.mxu0
    %196 = vdwg.mxu0
    %vm197 = vcmp.gt.f32.partialorder %v194, 0.0
    %v198 = vmul.f32 %v194, 0.2
    %v199 = vsel %vm197, %v194, %v198
    %v200 = vpack.c.bf16 %v199, %v199
    %v201 = vld [vmem:[#allocation7] sm:$0xff]
    %v202 = vld [vmem:[#allocation7 + $0x8] sm:$0xff]
    %v203 = vld [vmem:[#allocation7 + $0x10] sm:$0xff]
    %v204 = vld [vmem:[#allocation7 + $0x18] sm:$0xff]
    %v205 = vld [vmem:[#allocation7 + $0x20] sm:$0xff]
    %v206 = vld [vmem:[#allocation7 + $0x28] sm:$0xff]
    %v207 = vld [vmem:[#allocation7 + $0x30] sm:$0xff]
    %v208 = vld [vmem:[#allocation7 + $0x38] sm:$0xff]
    %v209 = vld [vmem:[#allocation7 + $0x40] sm:$0xff]
    %v210 = vld [vmem:[#allocation7 + $0x48] sm:$0xff]
    %v211 = vld [vmem:[#allocation7 + $0x50] sm:$0xff]
    %v212 = vld [vmem:[#allocation7 + $0x58] sm:$0xff]
    %v213 = vld [vmem:[#allocation7 + $0x60] sm:$0xff]
    %v214 = vld [vmem:[#allocation7 + $0x68] sm:$0xff]
    %v215 = vld [vmem:[#allocation7 + $0x70] sm:$0xff]
    %v216 = vld [vmem:[#allocation7 + $0x78] sm:$0xff]
    %v217 = vld [vmem:[#allocation11 + $0x1] sm:$0x3]
    %v219 = vperm.slane %v217, 0
    %v220 = vperm.slane %v217, 1
    %v239 = vunpack.c.l.b16 %v201
    %v240 = vunpack.c.h.b16 %v201
    %v241 = vunpack.c.l.b16 %v202
    %v242 = vunpack.c.h.b16 %v202
    %v243 = vunpack.c.l.b16 %v203
    %v244 = vunpack.c.h.b16 %v203
    %v245 = vunpack.c.l.b16 %v204
    %v246 = vunpack.c.h.b16 %v204
    %v247 = vunpack.c.l.b16 %v205
    %v248 = vunpack.c.h.b16 %v205
    %v249 = vunpack.c.l.b16 %v206
    %v250 = vunpack.c.h.b16 %v206
    %v251 = vunpack.c.l.b16 %v207
    %v252 = vunpack.c.h.b16 %v207
    %v253 = vunpack.c.l.b16 %v208
    %v254 = vunpack.c.h.b16 %v208
    %v255 = vunpack.c.l.b16 %v209
    %v256 = vunpack.c.h.b16 %v209
    %v257 = vunpack.c.l.b16 %v210
    %v258 = vunpack.c.h.b16 %v210
    %v259 = vunpack.c.l.b16 %v211
    %v260 = vunpack.c.h.b16 %v211
    %v261 = vunpack.c.l.b16 %v212
    %v262 = vunpack.c.h.b16 %v212
    %v263 = vunpack.c.l.b16 %v213
    %v264 = vunpack.c.h.b16 %v213
    %v265 = vunpack.c.l.b16 %v214
    %v266 = vunpack.c.h.b16 %v214
    %v267 = vunpack.c.l.b16 %v215
    %v268 = vunpack.c.h.b16 %v215
    %v269 = vunpack.c.l.b16 %v216
    %v270 = vunpack.c.h.b16 %v216
    %v271 = vpack.c.b16 %v241, %v239
    %v272 = vpack.c.b16 %v242, %v240
    %v273 = vpack.c.b16 %v245, %v243
    %v274 = vpack.c.b16 %v246, %v244
    %v275 = vpack.c.b16 %v249, %v247
    %v276 = vpack.c.b16 %v250, %v248
    %v277 = vpack.c.b16 %v253, %v251
    %v278 = vpack.c.b16 %v254, %v252
    %v279 = vpack.c.b16 %v257, %v255
    %v280 = vpack.c.b16 %v258, %v256
    %v281 = vpack.c.b16 %v261, %v259
    %v282 = vpack.c.b16 %v262, %v260
    %v283 = vpack.c.b16 %v265, %v263
    %v284 = vpack.c.b16 %v266, %v264
    %v285 = vpack.c.b16 %v269, %v267
    %v286 = vpack.c.b16 %v270, %v268
    %303 = vmatpush.bf16.msra.mxu0 %v285
    %304 = vmatpush.bf16.msra.mxu0 %v283
    %305 = vmatpush.bf16.msra.mxu0 %v281
    %306 = vmatpush.bf16.msra.mxu0 %v279
    %307 = vmatpush.bf16.msra.mxu0 %v277
    %308 = vmatpush.bf16.msra.mxu0 %v275
    %309 = vmatpush.bf16.msra.mxu0 %v273
    %310 = vmatpush.bf16.msra.mxu0 %v271
    %311 = vmatmul.bf16.gmra.mxu0 %v200
    %v312 = vpop.f32.mrf.mxu0
    %v313 = vadd.f32 %v219, %v312
    %v314 = vpop.f32.mrf.mxu0
    %315 = vdwg.mxu0
    %316 = vmatpush.bf16.msra.mxu0 %v286
    %317 = vmatpush.bf16.msra.mxu0 %v284
    %318 = vmatpush.bf16.msra.mxu0 %v282
    %319 = vmatpush.bf16.msra.mxu0 %v280
    %320 = vmatpush.bf16.msra.mxu0 %v278
    %321 = vmatpush.bf16.msra.mxu0 %v276
    %322 = vmatpush.bf16.msra.mxu0 %v274
    %323 = vmatpush.bf16.msra.mxu0 %v272
    %324 = vmatmul.bf16.gmra.mxu0 %v200
    %v325 = vpop.f32.mrf.mxu0
    %v326 = vadd.f32 %v220, %v325
    %v327 = vpop.f32.mrf.mxu0
    %328 = vdwg.mxu0
    %v329 = vld [vmem:[#allocation11 + $0xf] sm:$0x3]
    %v330 = vld [vmem:[#allocation11 + $0x1d] sm:$0x3]
    %v331 = vrot.slane %v313, 4
    %v332 = vadd.f32 %v313, %v331
    %v333 = vrot.slane %v332, 2
    %v334 = vadd.f32 %v332, %v333
    %v335 = vrot.slane %v334, 1
    %v336 = vadd.f32 %v334, %v335
    %v337 = vrot.slane %v326, 4
    %v338 = vadd.f32 %v326, %v337
    %v339 = vrot.slane %v338, 2
    %v340 = vadd.f32 %v338, %v339
    %v341 = vrot.slane %v340, 1
    %v342 = vadd.f32 %v340, %v341
    %v343 = vrcp.pop 8.0
    %v344 = vmul.f32 8.0, %v343
    %v345 = vsub.f32 1.0, %v344
    %v346 = vmul.f32 %v343, %v345
    %v347 = vadd.f32 %v343, %v346
    %vm348 = vweird.f32 %v343
    %v349 = vsel %vm348, %v343, %v347
    %v350 = vmul.f32 %v336, %v349
    %v351 = vmul.f32 %v342, %v349
    %v352 = vsub.f32 %v313, %v350
    %v353 = vsub.f32 %v326, %v351
    %v354 = vmul.f32 %v352, %v352
    %v355 = vmul.f32 %v353, %v353
    %v356 = vrot.slane %v354, 4
    %v357 = vadd.f32 %v354, %v356
    %v358 = vrot.slane %v357, 2
    %v359 = vadd.f32 %v357, %v358
    %v360 = vrot.slane %v359, 1
    %v361 = vadd.f32 %v359, %v360
    %v362 = vrot.slane %v355, 4
    %v363 = vadd.f32 %v355, %v362
    %v364 = vrot.slane %v363, 2
    %v365 = vadd.f32 %v363, %v364
    %v366 = vrot.slane %v365, 1
    %v367 = vadd.f32 %v365, %v366
    %v368 = vmul.f32 %v361, %v349
    %v369 = vmul.f32 %v367, %v349
    %v371 = vperm.slane %v329, 0
    %v372 = vperm.slane %v329, 1
    %v375 = vmul.f32 %v371, %v352
    %v376 = vmul.f32 %v372, %v353
    %v377 = vadd.f32 %v368, 1e-05
    %v378 = vadd.f32 %v369, 1e-05
    %v379 = vrsqrt.pop %v377
    %v380 = vmul.f32 %v379, %v377
    %v381 = vmul.f32 %v380, %v379
    %v382 = vmul.f32 0.5, %v381
    %v383 = vsub.f32 1.5, %v382
    %v384 = vmul.f32 %v379, %v383
    %vm385 = vweird.f32 %v377
    %vm386 = vweird.f32 %v379
    %vm387 = vmor %vm385, %vm386
    %v388 = vsel %vm387, %v379, %v384
    %v389 = vrsqrt.pop %v378
    %v390 = vmul.f32 %v389, %v378
    %v391 = vmul.f32 %v390, %v389
    %v392 = vmul.f32 0.5, %v391
    %v393 = vsub.f32 1.5, %v392
    %v394 = vmul.f32 %v389, %v393
    %vm395 = vweird.f32 %v378
    %vm396 = vweird.f32 %v389
    %vm397 = vmor %vm395, %vm396
    %v398 = vsel %vm397, %v389, %v394
    %v399 = vmul.f32 %v375, %v388
    %v400 = vmul.f32 %v376, %v398
    %v402 = vperm.slane %v330, 0
    %v403 = vperm.slane %v330, 1
    %v406 = vadd.f32 %v399, %v402
    %v407 = vadd.f32 %v400, %v403
    %vm408 = vcmp.gt.f32.partialorder %v406, 0.0
    %vm409 = vcmp.gt.f32.partialorder %v407, 0.0
    %v410 = vmul.f32 %v406, 0.2
    %v411 = vmul.f32 %v407, 0.2
    %v412 = vsel %vm408, %v406, %v410
    %v413 = vsel %vm409, %v407, %v411
    %v414 = vpack.c.bf16 %v412, %v412
    %v415 = vpack.c.bf16 %v413, %v413
    %v416 = vld [vmem:[#allocation8] sm:$0xff]
    %v417 = vld [vmem:[#allocation8 + $0x8] sm:$0xff]
    %v418 = vld [vmem:[#allocation8 + $0x10] sm:$0xff]
    %v419 = vld [vmem:[#allocation8 + $0x18] sm:$0xff]
    %v420 = vld [vmem:[#allocation8 + $0x20] sm:$0xff]
    %v421 = vld [vmem:[#allocation8 + $0x28] sm:$0xff]
    %v422 = vld [vmem:[#allocation8 + $0x30] sm:$0xff]
    %v423 = vld [vmem:[#allocation8 + $0x38] sm:$0xff]
    %v424 = vld [vmem:[#allocation8 + $0x40] sm:$0xff]
    %v425 = vld [vmem:[#allocation8 + $0x48] sm:$0xff]
    %v426 = vld [vmem:[#allocation8 + $0x50] sm:$0xff]
    %v427 = vld [vmem:[#allocation8 + $0x58] sm:$0xff]
    %v428 = vld [vmem:[#allocation8 + $0x60] sm:$0xff]
    %v429 = vld [vmem:[#allocation8 + $0x68] sm:$0xff]
    %v430 = vld [vmem:[#allocation8 + $0x70] sm:$0xff]
    %v431 = vld [vmem:[#allocation8 + $0x78] sm:$0xff]
    %v432 = vld [vmem:[#allocation8 + $0x80] sm:$0xff]
    %v433 = vld [vmem:[#allocation8 + $0x88] sm:$0xff]
    %v434 = vld [vmem:[#allocation8 + $0x90] sm:$0xff]
    %v435 = vld [vmem:[#allocation8 + $0x98] sm:$0xff]
    %v436 = vld [vmem:[#allocation8 + $0xa0] sm:$0xff]
    %v437 = vld [vmem:[#allocation8 + $0xa8] sm:$0xff]
    %v438 = vld [vmem:[#allocation8 + $0xb0] sm:$0xff]
    %v439 = vld [vmem:[#allocation8 + $0xb8] sm:$0xff]
    %v440 = vld [vmem:[#allocation8 + $0xc0] sm:$0xff]
    %v441 = vld [vmem:[#allocation8 + $0xc8] sm:$0xff]
    %v442 = vld [vmem:[#allocation8 + $0xd0] sm:$0xff]
    %v443 = vld [vmem:[#allocation8 + $0xd8] sm:$0xff]
    %v444 = vld [vmem:[#allocation8 + $0xe0] sm:$0xff]
    %v445 = vld [vmem:[#allocation8 + $0xe8] sm:$0xff]
    %v446 = vld [vmem:[#allocation8 + $0xf0] sm:$0xff]
    %v447 = vld [vmem:[#allocation8 + $0xf8] sm:$0xff]
    %v448 = vld [vmem:[#allocation8 + $0x100] sm:$0xff]
    %v449 = vld [vmem:[#allocation8 + $0x108] sm:$0xff]
    %v450 = vld [vmem:[#allocation8 + $0x110] sm:$0xff]
    %v451 = vld [vmem:[#allocation8 + $0x118] sm:$0xff]
    %v452 = vld [vmem:[#allocation8 + $0x120] sm:$0xff]
    %v453 = vld [vmem:[#allocation8 + $0x128] sm:$0xff]
    %v454 = vld [vmem:[#allocation8 + $0x130] sm:$0xff]
    %v455 = vld [vmem:[#allocation8 + $0x138] sm:$0xff]
    %v456 = vld [vmem:[#allocation8 + $0x140] sm:$0xff]
    %v457 = vld [vmem:[#allocation8 + $0x148] sm:$0xff]
    %v458 = vld [vmem:[#allocation8 + $0x150] sm:$0xff]
    %v459 = vld [vmem:[#allocation8 + $0x158] sm:$0xff]
    %v460 = vld [vmem:[#allocation8 + $0x160] sm:$0xff]
    %v461 = vld [vmem:[#allocation8 + $0x168] sm:$0xff]
    %v462 = vld [vmem:[#allocation8 + $0x170] sm:$0xff]
    %v463 = vld [vmem:[#allocation8 + $0x178] sm:$0xff]
    %v464 = vld [vmem:[#allocation8 + $0x180] sm:$0xff]
    %v465 = vld [vmem:[#allocation8 + $0x188] sm:$0xff]
    %v466 = vld [vmem:[#allocation8 + $0x190] sm:$0xff]
    %v467 = vld [vmem:[#allocation8 + $0x198] sm:$0xff]
    %v468 = vld [vmem:[#allocation8 + $0x1a0] sm:$0xff]
    %v469 = vld [vmem:[#allocation8 + $0x1a8] sm:$0xff]
    %v470 = vld [vmem:[#allocation8 + $0x1b0] sm:$0xff]
    %v471 = vld [vmem:[#allocation8 + $0x1b8] sm:$0xff]
    %v472 = vld [vmem:[#allocation8 + $0x1c0] sm:$0xff]
    %v473 = vld [vmem:[#allocation8 + $0x1c8] sm:$0xff]
    %v474 = vld [vmem:[#allocation8 + $0x1d0] sm:$0xff]
    %v475 = vld [vmem:[#allocation8 + $0x1d8] sm:$0xff]
    %v476 = vld [vmem:[#allocation8 + $0x1e0] sm:$0xff]
    %v477 = vld [vmem:[#allocation8 + $0x1e8] sm:$0xff]
    %v478 = vld [vmem:[#allocation8 + $0x1f0] sm:$0xff]
    %v479 = vld [vmem:[#allocation8 + $0x1f8] sm:$0xff]
    %v480 = vld [vmem:[#allocation11 + $0x3] sm:$0xf]
    %v482 = vperm.slane %v480, 0
    %v483 = vperm.slane %v480, 1
    %v484 = vperm.slane %v480, 2
    %v485 = vperm.slane %v480, 3
    %v554 = vunpack.c.l.b16 %v416
    %v555 = vunpack.c.h.b16 %v416
    %v556 = vunpack.c.l.b16 %v417
    %v557 = vunpack.c.h.b16 %v417
    %v558 = vunpack.c.l.b16 %v418
    %v559 = vunpack.c.h.b16 %v418
    %v560 = vunpack.c.l.b16 %v419
    %v561 = vunpack.c.h.b16 %v419
    %v562 = vunpack.c.l.b16 %v420
    %v563 = vunpack.c.h.b16 %v420
    %v564 = vunpack.c.l.b16 %v421
    %v565 = vunpack.c.h.b16 %v421
    %v566 = vunpack.c.l.b16 %v422
    %v567 = vunpack.c.h.b16 %v422
    %v568 = vunpack.c.l.b16 %v423
    %v569 = vunpack.c.h.b16 %v423
    %v570 = vunpack.c.l.b16 %v424
    %v571 = vunpack.c.h.b16 %v424
    %v572 = vunpack.c.l.b16 %v425
    %v573 = vunpack.c.h.b16 %v425
    %v574 = vunpack.c.l.b16 %v426
    %v575 = vunpack.c.h.b16 %v426
    %v576 = vunpack.c.l.b16 %v427
    %v577 = vunpack.c.h.b16 %v427
    %v578 = vunpack.c.l.b16 %v428
    %v579 = vunpack.c.h.b16 %v428
    %v580 = vunpack.c.l.b16 %v429
    %v581 = vunpack.c.h.b16 %v429
    %v582 = vunpack.c.l.b16 %v430
    %v583 = vunpack.c.h.b16 %v430
    %v584 = vunpack.c.l.b16 %v431
    %v585 = vunpack.c.h.b16 %v431
    %v586 = vunpack.c.l.b16 %v432
    %v587 = vunpack.c.h.b16 %v432
    %v588 = vunpack.c.l.b16 %v433
    %v589 = vunpack.c.h.b16 %v433
    %v590 = vunpack.c.l.b16 %v434
    %v591 = vunpack.c.h.b16 %v434
    %v592 = vunpack.c.l.b16 %v435
    %v593 = vunpack.c.h.b16 %v435
    %v594 = vunpack.c.l.b16 %v436
    %v595 = vunpack.c.h.b16 %v436
    %v596 = vunpack.c.l.b16 %v437
    %v597 = vunpack.c.h.b16 %v437
    %v598 = vunpack.c.l.b16 %v438
    %v599 = vunpack.c.h.b16 %v438
    %v600 = vunpack.c.l.b16 %v439
    %v601 = vunpack.c.h.b16 %v439
    %v602 = vunpack.c.l.b16 %v440
    %v603 = vunpack.c.h.b16 %v440
    %v604 = vunpack.c.l.b16 %v441
    %v605 = vunpack.c.h.b16 %v441
    %v606 = vunpack.c.l.b16 %v442
    %v607 = vunpack.c.h.b16 %v442
    %v608 = vunpack.c.l.b16 %v443
    %v609 = vunpack.c.h.b16 %v443
    %v610 = vunpack.c.l.b16 %v444
    %v611 = vunpack.c.h.b16 %v444
    %v612 = vunpack.c.l.b16 %v445
    %v613 = vunpack.c.h.b16 %v445
    %v614 = vunpack.c.l.b16 %v446
    %v615 = vunpack.c.h.b16 %v446
    %v616 = vunpack.c.l.b16 %v447
    %v617 = vunpack.c.h.b16 %v447
    %v618 = vunpack.c.l.b16 %v448
    %v619 = vunpack.c.h.b16 %v448
    %v620 = vunpack.c.l.b16 %v449
    %v621 = vunpack.c.h.b16 %v449
    %v622 = vunpack.c.l.b16 %v450
    %v623 = vunpack.c.h.b16 %v450
    %v624 = vunpack.c.l.b16 %v451
    %v625 = vunpack.c.h.b16 %v451
    %v626 = vunpack.c.l.b16 %v452
    %v627 = vunpack.c.h.b16 %v452
    %v628 = vunpack.c.l.b16 %v453
    %v629 = vunpack.c.h.b16 %v453
    %v630 = vunpack.c.l.b16 %v454
    %v631 = vunpack.c.h.b16 %v454
    %v632 = vunpack.c.l.b16 %v455
    %v633 = vunpack.c.h.b16 %v455
    %v634 = vunpack.c.l.b16 %v456
    %v635 = vunpack.c.h.b16 %v456
    %v636 = vunpack.c.l.b16 %v457
    %v637 = vunpack.c.h.b16 %v457
    %v638 = vunpack.c.l.b16 %v458
    %v639 = vunpack.c.h.b16 %v458
    %v640 = vunpack.c.l.b16 %v459
    %v641 = vunpack.c.h.b16 %v459
    %v642 = vunpack.c.l.b16 %v460
    %v643 = vunpack.c.h.b16 %v460
    %v644 = vunpack.c.l.b16 %v461
    %v645 = vunpack.c.h.b16 %v461
    %v646 = vunpack.c.l.b16 %v462
    %v647 = vunpack.c.h.b16 %v462
    %v648 = vunpack.c.l.b16 %v463
    %v649 = vunpack.c.h.b16 %v463
    %v650 = vunpack.c.l.b16 %v464
    %v651 = vunpack.c.h.b16 %v464
    %v652 = vunpack.c.l.b16 %v465
    %v653 = vunpack.c.h.b16 %v465
    %v654 = vunpack.c.l.b16 %v466
    %v655 = vunpack.c.h.b16 %v466
    %v656 = vunpack.c.l.b16 %v467
    %v657 = vunpack.c.h.b16 %v467
    %v658 = vunpack.c.l.b16 %v468
    %v659 = vunpack.c.h.b16 %v468
    %v660 = vunpack.c.l.b16 %v469
    %v661 = vunpack.c.h.b16 %v469
    %v662 = vunpack.c.l.b16 %v470
    %v663 = vunpack.c.h.b16 %v470
    %v664 = vunpack.c.l.b16 %v471
    %v665 = vunpack.c.h.b16 %v471
    %v666 = vunpack.c.l.b16 %v472
    %v667 = vunpack.c.h.b16 %v472
    %v668 = vunpack.c.l.b16 %v473
    %v669 = vunpack.c.h.b16 %v473
    %v670 = vunpack.c.l.b16 %v474
    %v671 = vunpack.c.h.b16 %v474
    %v672 = vunpack.c.l.b16 %v475
    %v673 = vunpack.c.h.b16 %v475
    %v674 = vunpack.c.l.b16 %v476
    %v675 = vunpack.c.h.b16 %v476
    %v676 = vunpack.c.l.b16 %v477
    %v677 = vunpack.c.h.b16 %v477
    %v678 = vunpack.c.l.b16 %v478
    %v679 = vunpack.c.h.b16 %v478
    %v680 = vunpack.c.l.b16 %v479
    %v681 = vunpack.c.h.b16 %v479
    %v682 = vpack.c.b16 %v558, %v554
    %v683 = vpack.c.b16 %v559, %v555
    %v684 = vpack.c.b16 %v560, %v556
    %v685 = vpack.c.b16 %v561, %v557
    %v686 = vpack.c.b16 %v566, %v562
    %v687 = vpack.c.b16 %v567, %v563
    %v688 = vpack.c.b16 %v568, %v564
    %v689 = vpack.c.b16 %v569, %v565
    %v690 = vpack.c.b16 %v574, %v570
    %v691 = vpack.c.b16 %v575, %v571
    %v692 = vpack.c.b16 %v576, %v572
    %v693 = vpack.c.b16 %v577, %v573
    %v694 = vpack.c.b16 %v582, %v578
    %v695 = vpack.c.b16 %v583, %v579
    %v696 = vpack.c.b16 %v584, %v580
    %v697 = vpack.c.b16 %v585, %v581
    %v698 = vpack.c.b16 %v590, %v586
    %v699 = vpack.c.b16 %v591, %v587
    %v700 = vpack.c.b16 %v592, %v588
    %v701 = vpack.c.b16 %v593, %v589
    %v702 = vpack.c.b16 %v598, %v594
    %v703 = vpack.c.b16 %v599, %v595
    %v704 = vpack.c.b16 %v600, %v596
    %v705 = vpack.c.b16 %v601, %v597
    %v706 = vpack.c.b16 %v606, %v602
    %v707 = vpack.c.b16 %v607, %v603
    %v708 = vpack.c.b16 %v608, %v604
    %v709 = vpack.c.b16 %v609, %v605
    %v710 = vpack.c.b16 %v614, %v610
    %v711 = vpack.c.b16 %v615, %v611
    %v712 = vpack.c.b16 %v616, %v612
    %v713 = vpack.c.b16 %v617, %v613
    %v714 = vpack.c.b16 %v622, %v618
    %v715 = vpack.c.b16 %v623, %v619
    %v716 = vpack.c.b16 %v624, %v620
    %v717 = vpack.c.b16 %v625, %v621
    %v718 = vpack.c.b16 %v630, %v626
    %v719 = vpack.c.b16 %v631, %v627
    %v720 = vpack.c.b16 %v632, %v628
    %v721 = vpack.c.b16 %v633, %v629
    %v722 = vpack.c.b16 %v638, %v634
    %v723 = vpack.c.b16 %v639, %v635
    %v724 = vpack.c.b16 %v640, %v636
    %v725 = vpack.c.b16 %v641, %v637
    %v726 = vpack.c.b16 %v646, %v642
    %v727 = vpack.c.b16 %v647, %v643
    %v728 = vpack.c.b16 %v648, %v644
    %v729 = vpack.c.b16 %v649, %v645
    %v730 = vpack.c.b16 %v654, %v650
    %v731 = vpack.c.b16 %v655, %v651
    %v732 = vpack.c.b16 %v656, %v652
    %v733 = vpack.c.b16 %v657, %v653
    %v734 = vpack.c.b16 %v662, %v658
    %v735 = vpack.c.b16 %v663, %v659
    %v736 = vpack.c.b16 %v664, %v660
    %v737 = vpack.c.b16 %v665, %v661
    %v738 = vpack.c.b16 %v670, %v666
    %v739 = vpack.c.b16 %v671, %v667
    %v740 = vpack.c.b16 %v672, %v668
    %v741 = vpack.c.b16 %v673, %v669
    %v742 = vpack.c.b16 %v678, %v674
    %v743 = vpack.c.b16 %v679, %v675
    %v744 = vpack.c.b16 %v680, %v676
    %v745 = vpack.c.b16 %v681, %v677
    %810 = vmatpush.bf16.msra.mxu0 %v710
    %811 = vmatpush.bf16.msra.mxu0 %v706
    %812 = vmatpush.bf16.msra.mxu0 %v702
    %813 = vmatpush.bf16.msra.mxu0 %v698
    %814 = vmatpush.bf16.msra.mxu0 %v694
    %815 = vmatpush.bf16.msra.mxu0 %v690
    %816 = vmatpush.bf16.msra.mxu0 %v686
    %817 = vmatpush.bf16.msra.mxu0 %v682
    %818 = vmatmul.bf16.gmra.mxu0 %v414
    %v819 = vpop.f32.mrf.mxu0
    %v820 = vadd.f32 %v482, %v819
    %v821 = vpop.f32.mrf.mxu0
    %822 = vdwg.mxu0
    %823 = vmatpush.bf16.msra.mxu0 %v742
    %824 = vmatpush.bf16.msra.mxu0 %v738
    %825 = vmatpush.bf16.msra.mxu0 %v734
    %826 = vmatpush.bf16.msra.mxu0 %v730
    %827 = vmatpush.bf16.msra.mxu0 %v726
    %828 = vmatpush.bf16.msra.mxu0 %v722
    %829 = vmatpush.bf16.msra.mxu0 %v718
    %830 = vmatpush.bf16.msra.mxu0 %v714
    %831 = vmatmul.bf16.gmra.mxu0 %v415
    %v832 = vpop.f32.mrf.mxu0
    %v833 = vadd.f32 %v820, %v832
    %v834 = vpop.f32.mrf.mxu0
    %835 = vdwg.mxu0
    %836 = vmatpush.bf16.msra.mxu0 %v711
    %837 = vmatpush.bf16.msra.mxu0 %v707
    %838 = vmatpush.bf16.msra.mxu0 %v703
    %839 = vmatpush.bf16.msra.mxu0 %v699
    %840 = vmatpush.bf16.msra.mxu0 %v695
    %841 = vmatpush.bf16.msra.mxu0 %v691
    %842 = vmatpush.bf16.msra.mxu0 %v687
    %843 = vmatpush.bf16.msra.mxu0 %v683
    %844 = vmatmul.bf16.gmra.mxu0 %v414
    %v845 = vpop.f32.mrf.mxu0
    %v846 = vadd.f32 %v483, %v845
    %v847 = vpop.f32.mrf.mxu0
    %848 = vdwg.mxu0
    %849 = vmatpush.bf16.msra.mxu0 %v743
    %850 = vmatpush.bf16.msra.mxu0 %v739
    %851 = vmatpush.bf16.msra.mxu0 %v735
    %852 = vmatpush.bf16.msra.mxu0 %v731
    %853 = vmatpush.bf16.msra.mxu0 %v727
    %854 = vmatpush.bf16.msra.mxu0 %v723
    %855 = vmatpush.bf16.msra.mxu0 %v719
    %856 = vmatpush.bf16.msra.mxu0 %v715
    %857 = vmatmul.bf16.gmra.mxu0 %v415
    %v858 = vpop.f32.mrf.mxu0
    %v859 = vadd.f32 %v846, %v858
    %v860 = vpop.f32.mrf.mxu0
    %861 = vdwg.mxu0
    %862 = vmatpush.bf16.msra.mxu0 %v712
    %863 = vmatpush.bf16.msra.mxu0 %v708
    %864 = vmatpush.bf16.msra.mxu0 %v704
    %865 = vmatpush.bf16.msra.mxu0 %v700
    %866 = vmatpush.bf16.msra.mxu0 %v696
    %867 = vmatpush.bf16.msra.mxu0 %v692
    %868 = vmatpush.bf16.msra.mxu0 %v688
    %869 = vmatpush.bf16.msra.mxu0 %v684
    %870 = vmatmul.bf16.gmra.mxu0 %v414
    %v871 = vpop.f32.mrf.mxu0
    %v872 = vadd.f32 %v484, %v871
    %v873 = vpop.f32.mrf.mxu0
    %874 = vdwg.mxu0
    %875 = vmatpush.bf16.msra.mxu0 %v744
    %876 = vmatpush.bf16.msra.mxu0 %v740
    %877 = vmatpush.bf16.msra.mxu0 %v736
    %878 = vmatpush.bf16.msra.mxu0 %v732
    %879 = vmatpush.bf16.msra.mxu0 %v728
    %880 = vmatpush.bf16.msra.mxu0 %v724
    %881 = vmatpush.bf16.msra.mxu0 %v720
    %882 = vmatpush.bf16.msra.mxu0 %v716
    %883 = vmatmul.bf16.gmra.mxu0 %v415
    %v884 = vpop.f32.mrf.mxu0
    %v885 = vadd.f32 %v872, %v884
    %v886 = vpop.f32.mrf.mxu0
    %887 = vdwg.mxu0
    %888 = vmatpush.bf16.msra.mxu0 %v713
    %889 = vmatpush.bf16.msra.mxu0 %v709
    %890 = vmatpush.bf16.msra.mxu0 %v705
    %891 = vmatpush.bf16.msra.mxu0 %v701
    %892 = vmatpush.bf16.msra.mxu0 %v697
    %893 = vmatpush.bf16.msra.mxu0 %v693
    %894 = vmatpush.bf16.msra.mxu0 %v689
    %895 = vmatpush.bf16.msra.mxu0 %v685
    %896 = vmatmul.bf16.gmra.mxu0 %v414
    %v897 = vpop.f32.mrf.mxu0
    %v898 = vadd.f32 %v485, %v897
    %v899 = vpop.f32.mrf.mxu0
    %900 = vdwg.mxu0
    %901 = vmatpush.bf16.msra.mxu0 %v745
    %902 = vmatpush.bf16.msra.mxu0 %v741
    %903 = vmatpush.bf16.msra.mxu0 %v737
    %904 = vmatpush.bf16.msra.mxu0 %v733
    %905 = vmatpush.bf16.msra.mxu0 %v729
    %906 = vmatpush.bf16.msra.mxu0 %v725
    %907 = vmatpush.bf16.msra.mxu0 %v721
    %908 = vmatpush.bf16.msra.mxu0 %v717
    %909 = vmatmul.bf16.gmra.mxu0 %v415
    %v910 = vpop.f32.mrf.mxu0
    %v911 = vadd.f32 %v898, %v910
    %v912 = vpop.f32.mrf.mxu0
    %913 = vdwg.mxu0
    %v914 = vld [vmem:[#allocation11 + $0x11] sm:$0xf]
    %v915 = vld [vmem:[#allocation11 + $0x1f] sm:$0xf]
    %v916 = vrot.slane %v833, 4
    %v917 = vadd.f32 %v833, %v916
    %v918 = vrot.slane %v917, 2
    %v919 = vadd.f32 %v917, %v918
    %v920 = vrot.slane %v919, 1
    %v921 = vadd.f32 %v919, %v920
    %v922 = vrot.slane %v859, 4
    %v923 = vadd.f32 %v859, %v922
    %v924 = vrot.slane %v923, 2
    %v925 = vadd.f32 %v923, %v924
    %v926 = vrot.slane %v925, 1
    %v927 = vadd.f32 %v925, %v926
    %v928 = vrot.slane %v885, 4
    %v929 = vadd.f32 %v885, %v928
    %v930 = vrot.slane %v929, 2
    %v931 = vadd.f32 %v929, %v930
    %v932 = vrot.slane %v931, 1
    %v933 = vadd.f32 %v931, %v932
    %v934 = vrot.slane %v911, 4
    %v935 = vadd.f32 %v911, %v934
    %v936 = vrot.slane %v935, 2
    %v937 = vadd.f32 %v935, %v936
    %v938 = vrot.slane %v937, 1
    %v939 = vadd.f32 %v937, %v938
    %v940 = vmul.f32 %v921, %v349
    %v941 = vmul.f32 %v927, %v349
    %v942 = vmul.f32 %v933, %v349
    %v943 = vmul.f32 %v939, %v349
    %v944 = vsub.f32 %v833, %v940
    %v945 = vsub.f32 %v859, %v941
    %v946 = vsub.f32 %v885, %v942
    %v947 = vsub.f32 %v911, %v943
    %v948 = vmul.f32 %v944, %v944
    %v949 = vmul.f32 %v945, %v945
    %v950 = vmul.f32 %v946, %v946
    %v951 = vmul.f32 %v947, %v947
    %v952 = vrot.slane %v948, 4
    %v953 = vadd.f32 %v948, %v952
    %v954 = vrot.slane %v953, 2
    %v955 = vadd.f32 %v953, %v954
    %v956 = vrot.slane %v955, 1
    %v957 = vadd.f32 %v955, %v956
    %v958 = vrot.slane %v949, 4
    %v959 = vadd.f32 %v949, %v958
    %v960 = vrot.slane %v959, 2
    %v961 = vadd.f32 %v959, %v960
    %v962 = vrot.slane %v961, 1
    %v963 = vadd.f32 %v961, %v962
    %v964 = vrot.slane %v950, 4
    %v965 = vadd.f32 %v950, %v964
    %v966 = vrot.slane %v965, 2
    %v967 = vadd.f32 %v965, %v966
    %v968 = vrot.slane %v967, 1
    %v969 = vadd.f32 %v967, %v968
    %v970 = vrot.slane %v951, 4
    %v971 = vadd.f32 %v951, %v970
    %v972 = vrot.slane %v971, 2
    %v973 = vadd.f32 %v971, %v972
    %v974 = vrot.slane %v973, 1
    %v975 = vadd.f32 %v973, %v974
    %v976 = vmul.f32 %v957, %v349
    %v977 = vmul.f32 %v963, %v349
    %v978 = vmul.f32 %v969, %v349
    %v979 = vmul.f32 %v975, %v349
    %v981 = vperm.slane %v914, 0
    %v982 = vperm.slane %v914, 1
    %v983 = vperm.slane %v914, 2
    %v984 = vperm.slane %v914, 3
    %v989 = vmul.f32 %v981, %v944
    %v990 = vmul.f32 %v982, %v945
    %v991 = vmul.f32 %v983, %v946
    %v992 = vmul.f32 %v984, %v947
    %v993 = vadd.f32 %v976, 1e-05
    %v994 = vadd.f32 %v977, 1e-05
    %v995 = vadd.f32 %v978, 1e-05
    %v996 = vadd.f32 %v979, 1e-05
    %v997 = vrsqrt.pop %v993
    %v998 = vmul.f32 %v997, %v993
    %v999 = vmul.f32 %v998, %v997
    %v1000 = vmul.f32 0.5, %v999
    %v1001 = vsub.f32 1.5, %v1000
    %v1002 = vmul.f32 %v997, %v1001
    %vm1003 = vweird.f32 %v993
    %vm1004 = vweird.f32 %v997
    %vm1005 = vmor %vm1003, %vm1004
    %v1006 = vsel %vm1005, %v997, %v1002
    %v1007 = vrsqrt.pop %v994
    %v1008 = vmul.f32 %v1007, %v994
    %v1009 = vmul.f32 %v1008, %v1007
    %v1010 = vmul.f32 0.5, %v1009
    %v1011 = vsub.f32 1.5, %v1010
    %v1012 = vmul.f32 %v1007, %v1011
    %vm1013 = vweird.f32 %v994
    %vm1014 = vweird.f32 %v1007
    %vm1015 = vmor %vm1013, %vm1014
    %v1016 = vsel %vm1015, %v1007, %v1012
    %v1017 = vrsqrt.pop %v995
    %v1018 = vmul.f32 %v1017, %v995
    %v1019 = vmul.f32 %v1018, %v1017
    %v1020 = vmul.f32 0.5, %v1019
    %v1021 = vsub.f32 1.5, %v1020
    %v1022 = vmul.f32 %v1017, %v1021
    %vm1023 = vweird.f32 %v995
    %vm1024 = vweird.f32 %v1017
    %vm1025 = vmor %vm1023, %vm1024
    %v1026 = vsel %vm1025, %v1017, %v1022
    %v1027 = vrsqrt.pop %v996
    %v1028 = vmul.f32 %v1027, %v996
    %v1029 = vmul.f32 %v1028, %v1027
    %v1030 = vmul.f32 0.5, %v1029
    %v1031 = vsub.f32 1.5, %v1030
    %v1032 = vmul.f32 %v1027, %v1031
    %vm1033 = vweird.f32 %v996
    %vm1034 = vweird.f32 %v1027
    %vm1035 = vmor %vm1033, %vm1034
    %v1036 = vsel %vm1035, %v1027, %v1032
    %v1037 = vmul.f32 %v989, %v1006
    %v1038 = vmul.f32 %v990, %v1016
    %v1039 = vmul.f32 %v991, %v1026
    %v1040 = vmul.f32 %v992, %v1036
    %v1042 = vperm.slane %v915, 0
    %v1043 = vperm.slane %v915, 1
    %v1044 = vperm.slane %v915, 2
    %v1045 = vperm.slane %v915, 3
    %v1050 = vadd.f32 %v1037, %v1042
    %v1051 = vadd.f32 %v1038, %v1043
    %v1052 = vadd.f32 %v1039, %v1044
    %v1053 = vadd.f32 %v1040, %v1045
    %vm1054 = vcmp.gt.f32.partialorder %v1050, 0.0
    %vm1055 = vcmp.gt.f32.partialorder %v1051, 0.0
    %vm1056 = vcmp.gt.f32.partialorder %v1052, 0.0
    %vm1057 = vcmp.gt.f32.partialorder %v1053, 0.0
    %v1058 = vmul.f32 %v1050, 0.2
    %v1059 = vmul.f32 %v1051, 0.2
    %v1060 = vmul.f32 %v1052, 0.2
    %v1061 = vmul.f32 %v1053, 0.2
    %v1062 = vsel %vm1054, %v1050, %v1058
    %v1063 = vsel %vm1055, %v1051, %v1059
    %v1064 = vsel %vm1056, %v1052, %v1060
    %v1065 = vsel %vm1057, %v1053, %v1061
    %v1066 = vpack.c.bf16 %v1062, %v1062
    %v1067 = vpack.c.bf16 %v1063, %v1063
    %v1068 = vpack.c.bf16 %v1064, %v1064
    %v1069 = vpack.c.bf16 %v1065, %v1065
    %v1070 = vld [vmem:[#allocation10] sm:$0xff]
    %v1071 = vld [vmem:[#allocation10 + $0x8] sm:$0xff]
    %v1072 = vld [vmem:[#allocation10 + $0x10] sm:$0xff]
    %v1073 = vld [vmem:[#allocation10 + $0x18] sm:$0xff]
    %v1074 = vld [vmem:[#allocation10 + $0x20] sm:$0xff]
    %v1075 = vld [vmem:[#allocation10 + $0x28] sm:$0xff]
    %v1076 = vld [vmem:[#allocation10 + $0x30] sm:$0xff]
    %v1077 = vld [vmem:[#allocation10 + $0x38] sm:$0xff]
    %v1078 = vld [vmem:[#allocation10 + $0x40] sm:$0xff]
    %v1079 = vld [vmem:[#allocation10 + $0x48] sm:$0xff]
    %v1080 = vld [vmem:[#allocation10 + $0x50] sm:$0xff]
    %v1081 = vld [vmem:[#allocation10 + $0x58] sm:$0xff]
    %v1082 = vld [vmem:[#allocation10 + $0x60] sm:$0xff]
    %v1083 = vld [vmem:[#allocation10 + $0x68] sm:$0xff]
    %v1084 = vld [vmem:[#allocation10 + $0x70] sm:$0xff]
    %v1085 = vld [vmem:[#allocation10 + $0x78] sm:$0xff]
    %v1086 = vld [vmem:[#allocation10 + $0x80] sm:$0xff]
    %v1087 = vld [vmem:[#allocation10 + $0x88] sm:$0xff]
    %v1088 = vld [vmem:[#allocation10 + $0x90] sm:$0xff]
    %v1089 = vld [vmem:[#allocation10 + $0x98] sm:$0xff]
    %v1090 = vld [vmem:[#allocation10 + $0xa0] sm:$0xff]
    %v1091 = vld [vmem:[#allocation10 + $0xa8] sm:$0xff]
    %v1092 = vld [vmem:[#allocation10 + $0xb0] sm:$0xff]
    %v1093 = vld [vmem:[#allocation10 + $0xb8] sm:$0xff]
    %v1094 = vld [vmem:[#allocation10 + $0xc0] sm:$0xff]
    %v1095 = vld [vmem:[#allocation10 + $0xc8] sm:$0xff]
    %v1096 = vld [vmem:[#allocation10 + $0xd0] sm:$0xff]
    %v1097 = vld [vmem:[#allocation10 + $0xd8] sm:$0xff]
    %v1098 = vld [vmem:[#allocation10 + $0xe0] sm:$0xff]
    %v1099 = vld [vmem:[#allocation10 + $0xe8] sm:$0xff]
    %v1100 = vld [vmem:[#allocation10 + $0xf0] sm:$0xff]
    %v1101 = vld [vmem:[#allocation10 + $0xf8] sm:$0xff]
    %v1102 = vld [vmem:[#allocation10 + $0x100] sm:$0xff]
    %v1103 = vld [vmem:[#allocation10 + $0x108] sm:$0xff]
    %v1104 = vld [vmem:[#allocation10 + $0x110] sm:$0xff]
    %v1105 = vld [vmem:[#allocation10 + $0x118] sm:$0xff]
    %v1106 = vld [vmem:[#allocation10 + $0x120] sm:$0xff]
    %v1107 = vld [vmem:[#allocation10 + $0x128] sm:$0xff]
    %v1108 = vld [vmem:[#allocation10 + $0x130] sm:$0xff]
    %v1109 = vld [vmem:[#allocation10 + $0x138] sm:$0xff]
    %v1110 = vld [vmem:[#allocation10 + $0x140] sm:$0xff]
    %v1111 = vld [vmem:[#allocation10 + $0x148] sm:$0xff]
    %v1112 = vld [vmem:[#allocation10 + $0x150] sm:$0xff]
    %v1113 = vld [vmem:[#allocation10 + $0x158] sm:$0xff]
    %v1114 = vld [vmem:[#allocation10 + $0x160] sm:$0xff]
    %v1115 = vld [vmem:[#allocation10 + $0x168] sm:$0xff]
    %v1116 = vld [vmem:[#allocation10 + $0x170] sm:$0xff]
    %v1117 = vld [vmem:[#allocation10 + $0x178] sm:$0xff]
    %v1118 = vld [vmem:[#allocation10 + $0x180] sm:$0xff]
    %v1119 = vld [vmem:[#allocation10 + $0x188] sm:$0xff]
    %v1120 = vld [vmem:[#allocation10 + $0x190] sm:$0xff]
    %v1121 = vld [vmem:[#allocation10 + $0x198] sm:$0xff]
    %v1122 = vld [vmem:[#allocation10 + $0x1a0] sm:$0xff]
    %v1123 = vld [vmem:[#allocation10 + $0x1a8] sm:$0xff]
    %v1124 = vld [vmem:[#allocation10 + $0x1b0] sm:$0xff]
    %v1125 = vld [vmem:[#allocation10 + $0x1b8] sm:$0xff]
    %v1126 = vld [vmem:[#allocation10 + $0x1c0] sm:$0xff]
    %v1127 = vld [vmem:[#allocation10 + $0x1c8] sm:$0xff]
    %v1128 = vld [vmem:[#allocation10 + $0x1d0] sm:$0xff]
    %v1129 = vld [vmem:[#allocation10 + $0x1d8] sm:$0xff]
    %v1130 = vld [vmem:[#allocation10 + $0x1e0] sm:$0xff]
    %v1131 = vld [vmem:[#allocation10 + $0x1e8] sm:$0xff]
    %v1132 = vld [vmem:[#allocation10 + $0x1f0] sm:$0xff]
    %v1133 = vld [vmem:[#allocation10 + $0x1f8] sm:$0xff]
    %v1134 = vld [vmem:[#allocation10 + $0x200] sm:$0xff]
    %v1135 = vld [vmem:[#allocation10 + $0x208] sm:$0xff]
    %v1136 = vld [vmem:[#allocation10 + $0x210] sm:$0xff]
    %v1137 = vld [vmem:[#allocation10 + $0x218] sm:$0xff]
    %v1138 = vld [vmem:[#allocation10 + $0x220] sm:$0xff]
    %v1139 = vld [vmem:[#allocation10 + $0x228] sm:$0xff]
    %v1140 = vld [vmem:[#allocation10 + $0x230] sm:$0xff]
    %v1141 = vld [vmem:[#allocation10 + $0x238] sm:$0xff]
    %v1142 = vld [vmem:[#allocation10 + $0x240] sm:$0xff]
    %v1143 = vld [vmem:[#allocation10 + $0x248] sm:$0xff]
    %v1144 = vld [vmem:[#allocation10 + $0x250] sm:$0xff]
    %v1145 = vld [vmem:[#allocation10 + $0x258] sm:$0xff]
    %v1146 = vld [vmem:[#allocation10 + $0x260] sm:$0xff]
    %v1147 = vld [vmem:[#allocation10 + $0x268] sm:$0xff]
    %v1148 = vld [vmem:[#allocation10 + $0x270] sm:$0xff]
    %v1149 = vld [vmem:[#allocation10 + $0x278] sm:$0xff]
    %v1150 = vld [vmem:[#allocation10 + $0x280] sm:$0xff]
    %v1151 = vld [vmem:[#allocation10 + $0x288] sm:$0xff]
    %v1152 = vld [vmem:[#allocation10 + $0x290] sm:$0xff]
    %v1153 = vld [vmem:[#allocation10 + $0x298] sm:$0xff]
    %v1154 = vld [vmem:[#allocation10 + $0x2a0] sm:$0xff]
    %v1155 = vld [vmem:[#allocation10 + $0x2a8] sm:$0xff]
    %v1156 = vld [vmem:[#allocation10 + $0x2b0] sm:$0xff]
    %v1157 = vld [vmem:[#allocation10 + $0x2b8] sm:$0xff]
    %v1158 = vld [vmem:[#allocation10 + $0x2c0] sm:$0xff]
    %v1159 = vld [vmem:[#allocation10 + $0x2c8] sm:$0xff]
    %v1160 = vld [vmem:[#allocation10 + $0x2d0] sm:$0xff]
    %v1161 = vld [vmem:[#allocation10 + $0x2d8] sm:$0xff]
    %v1162 = vld [vmem:[#allocation10 + $0x2e0] sm:$0xff]
    %v1163 = vld [vmem:[#allocation10 + $0x2e8] sm:$0xff]
    %v1164 = vld [vmem:[#allocation10 + $0x2f0] sm:$0xff]
    %v1165 = vld [vmem:[#allocation10 + $0x2f8] sm:$0xff]
    %v1166 = vld [vmem:[#allocation10 + $0x300] sm:$0xff]
    %v1167 = vld [vmem:[#allocation10 + $0x308] sm:$0xff]
    %v1168 = vld [vmem:[#allocation10 + $0x310] sm:$0xff]
    %v1169 = vld [vmem:[#allocation10 + $0x318] sm:$0xff]
    %v1170 = vld [vmem:[#allocation10 + $0x320] sm:$0xff]
    %v1171 = vld [vmem:[#allocation10 + $0x328] sm:$0xff]
    %v1172 = vld [vmem:[#allocation10 + $0x330] sm:$0xff]
    %v1173 = vld [vmem:[#allocation10 + $0x338] sm:$0xff]
    %v1174 = vld [vmem:[#allocation10 + $0x340] sm:$0xff]
    %v1175 = vld [vmem:[#allocation10 + $0x348] sm:$0xff]
    %v1176 = vld [vmem:[#allocation10 + $0x350] sm:$0xff]
    %v1177 = vld [vmem:[#allocation10 + $0x358] sm:$0xff]
    %v1178 = vld [vmem:[#allocation10 + $0x360] sm:$0xff]
    %v1179 = vld [vmem:[#allocation10 + $0x368] sm:$0xff]
    %v1180 = vld [vmem:[#allocation10 + $0x370] sm:$0xff]
    %v1181 = vld [vmem:[#allocation10 + $0x378] sm:$0xff]
    %v1182 = vld [vmem:[#allocation10 + $0x380] sm:$0xff]
    %v1183 = vld [vmem:[#allocation10 + $0x388] sm:$0xff]
    %v1184 = vld [vmem:[#allocation10 + $0x390] sm:$0xff]
    %v1185 = vld [vmem:[#allocation10 + $0x398] sm:$0xff]
    %v1186 = vld [vmem:[#allocation10 + $0x3a0] sm:$0xff]
    %v1187 = vld [vmem:[#allocation10 + $0x3a8] sm:$0xff]
    %v1188 = vld [vmem:[#allocation10 + $0x3b0] sm:$0xff]
    %v1189 = vld [vmem:[#allocation10 + $0x3b8] sm:$0xff]
    %v1190 = vld [vmem:[#allocation10 + $0x3c0] sm:$0xff]
    %v1191 = vld [vmem:[#allocation10 + $0x3c8] sm:$0xff]
    %v1192 = vld [vmem:[#allocation10 + $0x3d0] sm:$0xff]
    %v1193 = vld [vmem:[#allocation10 + $0x3d8] sm:$0xff]
    %v1194 = vld [vmem:[#allocation10 + $0x3e0] sm:$0xff]
    %v1195 = vld [vmem:[#allocation10 + $0x3e8] sm:$0xff]
    %v1196 = vld [vmem:[#allocation10 + $0x3f0] sm:$0xff]
    %v1197 = vld [vmem:[#allocation10 + $0x3f8] sm:$0xff]
    %v1198 = vld [vmem:[#allocation10 + $0x400] sm:$0xff]
    %v1199 = vld [vmem:[#allocation10 + $0x408] sm:$0xff]
    %v1200 = vld [vmem:[#allocation10 + $0x410] sm:$0xff]
    %v1201 = vld [vmem:[#allocation10 + $0x418] sm:$0xff]
    %v1202 = vld [vmem:[#allocation10 + $0x420] sm:$0xff]
    %v1203 = vld [vmem:[#allocation10 + $0x428] sm:$0xff]
    %v1204 = vld [vmem:[#allocation10 + $0x430] sm:$0xff]
    %v1205 = vld [vmem:[#allocation10 + $0x438] sm:$0xff]
    %v1206 = vld [vmem:[#allocation10 + $0x440] sm:$0xff]
    %v1207 = vld [vmem:[#allocation10 + $0x448] sm:$0xff]
    %v1208 = vld [vmem:[#allocation10 + $0x450] sm:$0xff]
    %v1209 = vld [vmem:[#allocation10 + $0x458] sm:$0xff]
    %v1210 = vld [vmem:[#allocation10 + $0x460] sm:$0xff]
    %v1211 = vld [vmem:[#allocation10 + $0x468] sm:$0xff]
    %v1212 = vld [vmem:[#allocation10 + $0x470] sm:$0xff]
    %v1213 = vld [vmem:[#allocation10 + $0x478] sm:$0xff]
    %v1214 = vld [vmem:[#allocation10 + $0x480] sm:$0xff]
    %v1215 = vld [vmem:[#allocation10 + $0x488] sm:$0xff]
    %v1216 = vld [vmem:[#allocation10 + $0x490] sm:$0xff]
    %v1217 = vld [vmem:[#allocation10 + $0x498] sm:$0xff]
    %v1218 = vld [vmem:[#allocation10 + $0x4a0] sm:$0xff]
    %v1219 = vld [vmem:[#allocation10 + $0x4a8] sm:$0xff]
    %v1220 = vld [vmem:[#allocation10 + $0x4b0] sm:$0xff]
    %v1221 = vld [vmem:[#allocation10 + $0x4b8] sm:$0xff]
    %v1222 = vld [vmem:[#allocation10 + $0x4c0] sm:$0xff]
    %v1223 = vld [vmem:[#allocation10 + $0x4c8] sm:$0xff]
    %v1224 = vld [vmem:[#allocation10 + $0x4d0] sm:$0xff]
    %v1225 = vld [vmem:[#allocation10 + $0x4d8] sm:$0xff]
    %v1226 = vld [vmem:[#allocation10 + $0x4e0] sm:$0xff]
    %v1227 = vld [vmem:[#allocation10 + $0x4e8] sm:$0xff]
    %v1228 = vld [vmem:[#allocation10 + $0x4f0] sm:$0xff]
    %v1229 = vld [vmem:[#allocation10 + $0x4f8] sm:$0xff]
    %v1230 = vld [vmem:[#allocation10 + $0x500] sm:$0xff]
    %v1231 = vld [vmem:[#allocation10 + $0x508] sm:$0xff]
    %v1232 = vld [vmem:[#allocation10 + $0x510] sm:$0xff]
    %v1233 = vld [vmem:[#allocation10 + $0x518] sm:$0xff]
    %v1234 = vld [vmem:[#allocation10 + $0x520] sm:$0xff]
    %v1235 = vld [vmem:[#allocation10 + $0x528] sm:$0xff]
    %v1236 = vld [vmem:[#allocation10 + $0x530] sm:$0xff]
    %v1237 = vld [vmem:[#allocation10 + $0x538] sm:$0xff]
    %v1238 = vld [vmem:[#allocation10 + $0x540] sm:$0xff]
    %v1239 = vld [vmem:[#allocation10 + $0x548] sm:$0xff]
    %v1240 = vld [vmem:[#allocation10 + $0x550] sm:$0xff]
    %v1241 = vld [vmem:[#allocation10 + $0x558] sm:$0xff]
    %v1242 = vld [vmem:[#allocation10 + $0x560] sm:$0xff]
    %v1243 = vld [vmem:[#allocation10 + $0x568] sm:$0xff]
    %v1244 = vld [vmem:[#allocation10 + $0x570] sm:$0xff]
    %v1245 = vld [vmem:[#allocation10 + $0x578] sm:$0xff]
    %v1246 = vld [vmem:[#allocation10 + $0x580] sm:$0xff]
    %v1247 = vld [vmem:[#allocation10 + $0x588] sm:$0xff]
    %v1248 = vld [vmem:[#allocation10 + $0x590] sm:$0xff]
    %v1249 = vld [vmem:[#allocation10 + $0x598] sm:$0xff]
    %v1250 = vld [vmem:[#allocation10 + $0x5a0] sm:$0xff]
    %v1251 = vld [vmem:[#allocation10 + $0x5a8] sm:$0xff]
    %v1252 = vld [vmem:[#allocation10 + $0x5b0] sm:$0xff]
    %v1253 = vld [vmem:[#allocation10 + $0x5b8] sm:$0xff]
    %v1254 = vld [vmem:[#allocation10 + $0x5c0] sm:$0xff]
    %v1255 = vld [vmem:[#allocation10 + $0x5c8] sm:$0xff]
    %v1256 = vld [vmem:[#allocation10 + $0x5d0] sm:$0xff]
    %v1257 = vld [vmem:[#allocation10 + $0x5d8] sm:$0xff]
    %v1258 = vld [vmem:[#allocation10 + $0x5e0] sm:$0xff]
    %v1259 = vld [vmem:[#allocation10 + $0x5e8] sm:$0xff]
    %v1260 = vld [vmem:[#allocation10 + $0x5f0] sm:$0xff]
    %v1261 = vld [vmem:[#allocation10 + $0x5f8] sm:$0xff]
    %v1262 = vld [vmem:[#allocation10 + $0x600] sm:$0xff]
    %v1263 = vld [vmem:[#allocation10 + $0x608] sm:$0xff]
    %v1264 = vld [vmem:[#allocation10 + $0x610] sm:$0xff]
    %v1265 = vld [vmem:[#allocation10 + $0x618] sm:$0xff]
    %v1266 = vld [vmem:[#allocation10 + $0x620] sm:$0xff]
    %v1267 = vld [vmem:[#allocation10 + $0x628] sm:$0xff]
    %v1268 = vld [vmem:[#allocation10 + $0x630] sm:$0xff]
    %v1269 = vld [vmem:[#allocation10 + $0x638] sm:$0xff]
    %v1270 = vld [vmem:[#allocation10 + $0x640] sm:$0xff]
    %v1271 = vld [vmem:[#allocation10 + $0x648] sm:$0xff]
    %v1272 = vld [vmem:[#allocation10 + $0x650] sm:$0xff]
    %v1273 = vld [vmem:[#allocation10 + $0x658] sm:$0xff]
    %v1274 = vld [vmem:[#allocation10 + $0x660] sm:$0xff]
    %v1275 = vld [vmem:[#allocation10 + $0x668] sm:$0xff]
    %v1276 = vld [vmem:[#allocation10 + $0x670] sm:$0xff]
    %v1277 = vld [vmem:[#allocation10 + $0x678] sm:$0xff]
    %v1278 = vld [vmem:[#allocation10 + $0x680] sm:$0xff]
    %v1279 = vld [vmem:[#allocation10 + $0x688] sm:$0xff]
    %v1280 = vld [vmem:[#allocation10 + $0x690] sm:$0xff]
    %v1281 = vld [vmem:[#allocation10 + $0x698] sm:$0xff]
    %v1282 = vld [vmem:[#allocation10 + $0x6a0] sm:$0xff]
    %v1283 = vld [vmem:[#allocation10 + $0x6a8] sm:$0xff]
    %v1284 = vld [vmem:[#allocation10 + $0x6b0] sm:$0xff]
    %v1285 = vld [vmem:[#allocation10 + $0x6b8] sm:$0xff]
    %v1286 = vld [vmem:[#allocation10 + $0x6c0] sm:$0xff]
    %v1287 = vld [vmem:[#allocation10 + $0x6c8] sm:$0xff]
    %v1288 = vld [vmem:[#allocation10 + $0x6d0] sm:$0xff]
    %v1289 = vld [vmem:[#allocation10 + $0x6d8] sm:$0xff]
    %v1290 = vld [vmem:[#allocation10 + $0x6e0] sm:$0xff]
    %v1291 = vld [vmem:[#allocation10 + $0x6e8] sm:$0xff]
    %v1292 = vld [vmem:[#allocation10 + $0x6f0] sm:$0xff]
    %v1293 = vld [vmem:[#allocation10 + $0x6f8] sm:$0xff]
    %v1294 = vld [vmem:[#allocation10 + $0x700] sm:$0xff]
    %v1295 = vld [vmem:[#allocation10 + $0x708] sm:$0xff]
    %v1296 = vld [vmem:[#allocation10 + $0x710] sm:$0xff]
    %v1297 = vld [vmem:[#allocation10 + $0x718] sm:$0xff]
    %v1298 = vld [vmem:[#allocation10 + $0x720] sm:$0xff]
    %v1299 = vld [vmem:[#allocation10 + $0x728] sm:$0xff]
    %v1300 = vld [vmem:[#allocation10 + $0x730] sm:$0xff]
    %v1301 = vld [vmem:[#allocation10 + $0x738] sm:$0xff]
    %v1302 = vld [vmem:[#allocation10 + $0x740] sm:$0xff]
    %v1303 = vld [vmem:[#allocation10 + $0x748] sm:$0xff]
    %v1304 = vld [vmem:[#allocation10 + $0x750] sm:$0xff]
    %v1305 = vld [vmem:[#allocation10 + $0x758] sm:$0xff]
    %v1306 = vld [vmem:[#allocation10 + $0x760] sm:$0xff]
    %v1307 = vld [vmem:[#allocation10 + $0x768] sm:$0xff]
    %v1308 = vld [vmem:[#allocation10 + $0x770] sm:$0xff]
    %v1309 = vld [vmem:[#allocation10 + $0x778] sm:$0xff]
    %v1310 = vld [vmem:[#allocation10 + $0x780] sm:$0xff]
    %v1311 = vld [vmem:[#allocation10 + $0x788] sm:$0xff]
    %v1312 = vld [vmem:[#allocation10 + $0x790] sm:$0xff]
    %v1313 = vld [vmem:[#allocation10 + $0x798] sm:$0xff]
    %v1314 = vld [vmem:[#allocation10 + $0x7a0] sm:$0xff]
    %v1315 = vld [vmem:[#allocation10 + $0x7a8] sm:$0xff]
    %v1316 = vld [vmem:[#allocation10 + $0x7b0] sm:$0xff]
    %v1317 = vld [vmem:[#allocation10 + $0x7b8] sm:$0xff]
    %v1318 = vld [vmem:[#allocation10 + $0x7c0] sm:$0xff]
    %v1319 = vld [vmem:[#allocation10 + $0x7c8] sm:$0xff]
    %v1320 = vld [vmem:[#allocation10 + $0x7d0] sm:$0xff]
    %v1321 = vld [vmem:[#allocation10 + $0x7d8] sm:$0xff]
    %v1322 = vld [vmem:[#allocation10 + $0x7e0] sm:$0xff]
    %v1323 = vld [vmem:[#allocation10 + $0x7e8] sm:$0xff]
    %v1324 = vld [vmem:[#allocation10 + $0x7f0] sm:$0xff]
    %v1325 = vld [vmem:[#allocation10 + $0x7f8] sm:$0xff]
    %v1326 = vld [vmem:[#allocation11 + $0x7] sm:$0xff]
    %v1328 = vperm.slane %v1326, 0
    %v1329 = vperm.slane %v1326, 1
    %v1330 = vperm.slane %v1326, 2
    %v1331 = vperm.slane %v1326, 3
    %v1332 = vperm.slane %v1326, 4
    %v1333 = vperm.slane %v1326, 5
    %v1334 = vperm.slane %v1326, 6
    %v1335 = vperm.slane %v1326, 7
    %v1600 = vunpack.c.l.b16 %v1070
    %v1601 = vunpack.c.h.b16 %v1070
    %v1602 = vunpack.c.l.b16 %v1071
    %v1603 = vunpack.c.h.b16 %v1071
    %v1604 = vunpack.c.l.b16 %v1072
    %v1605 = vunpack.c.h.b16 %v1072
    %v1606 = vunpack.c.l.b16 %v1073
    %v1607 = vunpack.c.h.b16 %v1073
    %v1608 = vunpack.c.l.b16 %v1074
    %v1609 = vunpack.c.h.b16 %v1074
    %v1610 = vunpack.c.l.b16 %v1075
    %v1611 = vunpack.c.h.b16 %v1075
    %v1612 = vunpack.c.l.b16 %v1076
    %v1613 = vunpack.c.h.b16 %v1076
    %v1614 = vunpack.c.l.b16 %v1077
    %v1615 = vunpack.c.h.b16 %v1077
    %v1616 = vunpack.c.l.b16 %v1078
    %v1617 = vunpack.c.h.b16 %v1078
    %v1618 = vunpack.c.l.b16 %v1079
    %v1619 = vunpack.c.h.b16 %v1079
    %v1620 = vunpack.c.l.b16 %v1080
    %v1621 = vunpack.c.h.b16 %v1080
    %v1622 = vunpack.c.l.b16 %v1081
    %v1623 = vunpack.c.h.b16 %v1081
    %v1624 = vunpack.c.l.b16 %v1082
    %v1625 = vunpack.c.h.b16 %v1082
    %v1626 = vunpack.c.l.b16 %v1083
    %v1627 = vunpack.c.h.b16 %v1083
    %v1628 = vunpack.c.l.b16 %v1084
    %v1629 = vunpack.c.h.b16 %v1084
    %v1630 = vunpack.c.l.b16 %v1085
    %v1631 = vunpack.c.h.b16 %v1085
    %v1632 = vunpack.c.l.b16 %v1086
    %v1633 = vunpack.c.h.b16 %v1086
    %v1634 = vunpack.c.l.b16 %v1087
    %v1635 = vunpack.c.h.b16 %v1087
    %v1636 = vunpack.c.l.b16 %v1088
    %v1637 = vunpack.c.h.b16 %v1088
    %v1638 = vunpack.c.l.b16 %v1089
    %v1639 = vunpack.c.h.b16 %v1089
    %v1640 = vunpack.c.l.b16 %v1090
    %v1641 = vunpack.c.h.b16 %v1090
    %v1642 = vunpack.c.l.b16 %v1091
    %v1643 = vunpack.c.h.b16 %v1091
    %v1644 = vunpack.c.l.b16 %v1092
    %v1645 = vunpack.c.h.b16 %v1092
    %v1646 = vunpack.c.l.b16 %v1093
    %v1647 = vunpack.c.h.b16 %v1093
    %v1648 = vunpack.c.l.b16 %v1094
    %v1649 = vunpack.c.h.b16 %v1094
    %v1650 = vunpack.c.l.b16 %v1095
    %v1651 = vunpack.c.h.b16 %v1095
    %v1652 = vunpack.c.l.b16 %v1096
    %v1653 = vunpack.c.h.b16 %v1096
    %v1654 = vunpack.c.l.b16 %v1097
    %v1655 = vunpack.c.h.b16 %v1097
    %v1656 = vunpack.c.l.b16 %v1098
    %v1657 = vunpack.c.h.b16 %v1098
    %v1658 = vunpack.c.l.b16 %v1099
    %v1659 = vunpack.c.h.b16 %v1099
    %v1660 = vunpack.c.l.b16 %v1100
    %v1661 = vunpack.c.h.b16 %v1100
    %v1662 = vunpack.c.l.b16 %v1101
    %v1663 = vunpack.c.h.b16 %v1101
    %v1664 = vunpack.c.l.b16 %v1102
    %v1665 = vunpack.c.h.b16 %v1102
    %v1666 = vunpack.c.l.b16 %v1103
    %v1667 = vunpack.c.h.b16 %v1103
    %v1668 = vunpack.c.l.b16 %v1104
    %v1669 = vunpack.c.h.b16 %v1104
    %v1670 = vunpack.c.l.b16 %v1105
    %v1671 = vunpack.c.h.b16 %v1105
    %v1672 = vunpack.c.l.b16 %v1106
    %v1673 = vunpack.c.h.b16 %v1106
    %v1674 = vunpack.c.l.b16 %v1107
    %v1675 = vunpack.c.h.b16 %v1107
    %v1676 = vunpack.c.l.b16 %v1108
    %v1677 = vunpack.c.h.b16 %v1108
    %v1678 = vunpack.c.l.b16 %v1109
    %v1679 = vunpack.c.h.b16 %v1109
    %v1680 = vunpack.c.l.b16 %v1110
    %v1681 = vunpack.c.h.b16 %v1110
    %v1682 = vunpack.c.l.b16 %v1111
    %v1683 = vunpack.c.h.b16 %v1111
    %v1684 = vunpack.c.l.b16 %v1112
    %v1685 = vunpack.c.h.b16 %v1112
    %v1686 = vunpack.c.l.b16 %v1113
    %v1687 = vunpack.c.h.b16 %v1113
    %v1688 = vunpack.c.l.b16 %v1114
    %v1689 = vunpack.c.h.b16 %v1114
    %v1690 = vunpack.c.l.b16 %v1115
    %v1691 = vunpack.c.h.b16 %v1115
    %v1692 = vunpack.c.l.b16 %v1116
    %v1693 = vunpack.c.h.b16 %v1116
    %v1694 = vunpack.c.l.b16 %v1117
    %v1695 = vunpack.c.h.b16 %v1117
    %v1696 = vunpack.c.l.b16 %v1118
    %v1697 = vunpack.c.h.b16 %v1118
    %v1698 = vunpack.c.l.b16 %v1119
    %v1699 = vunpack.c.h.b16 %v1119
    %v1700 = vunpack.c.l.b16 %v1120
    %v1701 = vunpack.c.h.b16 %v1120
    %v1702 = vunpack.c.l.b16 %v1121
    %v1703 = vunpack.c.h.b16 %v1121
    %v1704 = vunpack.c.l.b16 %v1122
    %v1705 = vunpack.c.h.b16 %v1122
    %v1706 = vunpack.c.l.b16 %v1123
    %v1707 = vunpack.c.h.b16 %v1123
    %v1708 = vunpack.c.l.b16 %v1124
    %v1709 = vunpack.c.h.b16 %v1124
    %v1710 = vunpack.c.l.b16 %v1125
    %v1711 = vunpack.c.h.b16 %v1125
    %v1712 = vunpack.c.l.b16 %v1126
    %v1713 = vunpack.c.h.b16 %v1126
    %v1714 = vunpack.c.l.b16 %v1127
    %v1715 = vunpack.c.h.b16 %v1127
    %v1716 = vunpack.c.l.b16 %v1128
    %v1717 = vunpack.c.h.b16 %v1128
    %v1718 = vunpack.c.l.b16 %v1129
    %v1719 = vunpack.c.h.b16 %v1129
    %v1720 = vunpack.c.l.b16 %v1130
    %v1721 = vunpack.c.h.b16 %v1130
    %v1722 = vunpack.c.l.b16 %v1131
    %v1723 = vunpack.c.h.b16 %v1131
    %v1724 = vunpack.c.l.b16 %v1132
    %v1725 = vunpack.c.h.b16 %v1132
    %v1726 = vunpack.c.l.b16 %v1133
    %v1727 = vunpack.c.h.b16 %v1133
    %v1728 = vunpack.c.l.b16 %v1134
    %v1729 = vunpack.c.h.b16 %v1134
    %v1730 = vunpack.c.l.b16 %v1135
    %v1731 = vunpack.c.h.b16 %v1135
    %v1732 = vunpack.c.l.b16 %v1136
    %v1733 = vunpack.c.h.b16 %v1136
    %v1734 = vunpack.c.l.b16 %v1137
    %v1735 = vunpack.c.h.b16 %v1137
    %v1736 = vunpack.c.l.b16 %v1138
    %v1737 = vunpack.c.h.b16 %v1138
    %v1738 = vunpack.c.l.b16 %v1139
    %v1739 = vunpack.c.h.b16 %v1139
    %v1740 = vunpack.c.l.b16 %v1140
    %v1741 = vunpack.c.h.b16 %v1140
    %v1742 = vunpack.c.l.b16 %v1141
    %v1743 = vunpack.c.h.b16 %v1141
    %v1744 = vunpack.c.l.b16 %v1142
    %v1745 = vunpack.c.h.b16 %v1142
    %v1746 = vunpack.c.l.b16 %v1143
    %v1747 = vunpack.c.h.b16 %v1143
    %v1748 = vunpack.c.l.b16 %v1144
    %v1749 = vunpack.c.h.b16 %v1144
    %v1750 = vunpack.c.l.b16 %v1145
    %v1751 = vunpack.c.h.b16 %v1145
    %v1752 = vunpack.c.l.b16 %v1146
    %v1753 = vunpack.c.h.b16 %v1146
    %v1754 = vunpack.c.l.b16 %v1147
    %v1755 = vunpack.c.h.b16 %v1147
    %v1756 = vunpack.c.l.b16 %v1148
    %v1757 = vunpack.c.h.b16 %v1148
    %v1758 = vunpack.c.l.b16 %v1149
    %v1759 = vunpack.c.h.b16 %v1149
    %v1760 = vunpack.c.l.b16 %v1150
    %v1761 = vunpack.c.h.b16 %v1150
    %v1762 = vunpack.c.l.b16 %v1151
    %v1763 = vunpack.c.h.b16 %v1151
    %v1764 = vunpack.c.l.b16 %v1152
    %v1765 = vunpack.c.h.b16 %v1152
    %v1766 = vunpack.c.l.b16 %v1153
    %v1767 = vunpack.c.h.b16 %v1153
    %v1768 = vunpack.c.l.b16 %v1154
    %v1769 = vunpack.c.h.b16 %v1154
    %v1770 = vunpack.c.l.b16 %v1155
    %v1771 = vunpack.c.h.b16 %v1155
    %v1772 = vunpack.c.l.b16 %v1156
    %v1773 = vunpack.c.h.b16 %v1156
    %v1774 = vunpack.c.l.b16 %v1157
    %v1775 = vunpack.c.h.b16 %v1157
    %v1776 = vunpack.c.l.b16 %v1158
    %v1777 = vunpack.c.h.b16 %v1158
    %v1778 = vunpack.c.l.b16 %v1159
    %v1779 = vunpack.c.h.b16 %v1159
    %v1780 = vunpack.c.l.b16 %v1160
    %v1781 = vunpack.c.h.b16 %v1160
    %v1782 = vunpack.c.l.b16 %v1161
    %v1783 = vunpack.c.h.b16 %v1161
    %v1784 = vunpack.c.l.b16 %v1162
    %v1785 = vunpack.c.h.b16 %v1162
    %v1786 = vunpack.c.l.b16 %v1163
    %v1787 = vunpack.c.h.b16 %v1163
    %v1788 = vunpack.c.l.b16 %v1164
    %v1789 = vunpack.c.h.b16 %v1164
    %v1790 = vunpack.c.l.b16 %v1165
    %v1791 = vunpack.c.h.b16 %v1165
    %v1792 = vunpack.c.l.b16 %v1166
    %v1793 = vunpack.c.h.b16 %v1166
    %v1794 = vunpack.c.l.b16 %v1167
    %v1795 = vunpack.c.h.b16 %v1167
    %v1796 = vunpack.c.l.b16 %v1168
    %v1797 = vunpack.c.h.b16 %v1168
    %v1798 = vunpack.c.l.b16 %v1169
    %v1799 = vunpack.c.h.b16 %v1169
    %v1800 = vunpack.c.l.b16 %v1170
    %v1801 = vunpack.c.h.b16 %v1170
    %v1802 = vunpack.c.l.b16 %v1171
    %v1803 = vunpack.c.h.b16 %v1171
    %v1804 = vunpack.c.l.b16 %v1172
    %v1805 = vunpack.c.h.b16 %v1172
    %v1806 = vunpack.c.l.b16 %v1173
    %v1807 = vunpack.c.h.b16 %v1173
    %v1808 = vunpack.c.l.b16 %v1174
    %v1809 = vunpack.c.h.b16 %v1174
    %v1810 = vunpack.c.l.b16 %v1175
    %v1811 = vunpack.c.h.b16 %v1175
    %v1812 = vunpack.c.l.b16 %v1176
    %v1813 = vunpack.c.h.b16 %v1176
    %v1814 = vunpack.c.l.b16 %v1177
    %v1815 = vunpack.c.h.b16 %v1177
    %v1816 = vunpack.c.l.b16 %v1178
    %v1817 = vunpack.c.h.b16 %v1178
    %v1818 = vunpack.c.l.b16 %v1179
    %v1819 = vunpack.c.h.b16 %v1179
    %v1820 = vunpack.c.l.b16 %v1180
    %v1821 = vunpack.c.h.b16 %v1180
    %v1822 = vunpack.c.l.b16 %v1181
    %v1823 = vunpack.c.h.b16 %v1181
    %v1824 = vunpack.c.l.b16 %v1182
    %v1825 = vunpack.c.h.b16 %v1182
    %v1826 = vunpack.c.l.b16 %v1183
    %v1827 = vunpack.c.h.b16 %v1183
    %v1828 = vunpack.c.l.b16 %v1184
    %v1829 = vunpack.c.h.b16 %v1184
    %v1830 = vunpack.c.l.b16 %v1185
    %v1831 = vunpack.c.h.b16 %v1185
    %v1832 = vunpack.c.l.b16 %v1186
    %v1833 = vunpack.c.h.b16 %v1186
    %v1834 = vunpack.c.l.b16 %v1187
    %v1835 = vunpack.c.h.b16 %v1187
    %v1836 = vunpack.c.l.b16 %v1188
    %v1837 = vunpack.c.h.b16 %v1188
    %v1838 = vunpack.c.l.b16 %v1189
    %v1839 = vunpack.c.h.b16 %v1189
    %v1840 = vunpack.c.l.b16 %v1190
    %v1841 = vunpack.c.h.b16 %v1190
    %v1842 = vunpack.c.l.b16 %v1191
    %v1843 = vunpack.c.h.b16 %v1191
    %v1844 = vunpack.c.l.b16 %v1192
    %v1845 = vunpack.c.h.b16 %v1192
    %v1846 = vunpack.c.l.b16 %v1193
    %v1847 = vunpack.c.h.b16 %v1193
    %v1848 = vunpack.c.l.b16 %v1194
    %v1849 = vunpack.c.h.b16 %v1194
    %v1850 = vunpack.c.l.b16 %v1195
    %v1851 = vunpack.c.h.b16 %v1195
    %v1852 = vunpack.c.l.b16 %v1196
    %v1853 = vunpack.c.h.b16 %v1196
    %v1854 = vunpack.c.l.b16 %v1197
    %v1855 = vunpack.c.h.b16 %v1197
    %v1856 = vunpack.c.l.b16 %v1198
    %v1857 = vunpack.c.h.b16 %v1198
    %v1858 = vunpack.c.l.b16 %v1199
    %v1859 = vunpack.c.h.b16 %v1199
    %v1860 = vunpack.c.l.b16 %v1200
    %v1861 = vunpack.c.h.b16 %v1200
    %v1862 = vunpack.c.l.b16 %v1201
    %v1863 = vunpack.c.h.b16 %v1201
    %v1864 = vunpack.c.l.b16 %v1202
    %v1865 = vunpack.c.h.b16 %v1202
    %v1866 = vunpack.c.l.b16 %v1203
    %v1867 = vunpack.c.h.b16 %v1203
    %v1868 = vunpack.c.l.b16 %v1204
    %v1869 = vunpack.c.h.b16 %v1204
    %v1870 = vunpack.c.l.b16 %v1205
    %v1871 = vunpack.c.h.b16 %v1205
    %v1872 = vunpack.c.l.b16 %v1206
    %v1873 = vunpack.c.h.b16 %v1206
    %v1874 = vunpack.c.l.b16 %v1207
    %v1875 = vunpack.c.h.b16 %v1207
    %v1876 = vunpack.c.l.b16 %v1208
    %v1877 = vunpack.c.h.b16 %v1208
    %v1878 = vunpack.c.l.b16 %v1209
    %v1879 = vunpack.c.h.b16 %v1209
    %v1880 = vunpack.c.l.b16 %v1210
    %v1881 = vunpack.c.h.b16 %v1210
    %v1882 = vunpack.c.l.b16 %v1211
    %v1883 = vunpack.c.h.b16 %v1211
    %v1884 = vunpack.c.l.b16 %v1212
    %v1885 = vunpack.c.h.b16 %v1212
    %v1886 = vunpack.c.l.b16 %v1213
    %v1887 = vunpack.c.h.b16 %v1213
    %v1888 = vunpack.c.l.b16 %v1214
    %v1889 = vunpack.c.h.b16 %v1214
    %v1890 = vunpack.c.l.b16 %v1215
    %v1891 = vunpack.c.h.b16 %v1215
    %v1892 = vunpack.c.l.b16 %v1216
    %v1893 = vunpack.c.h.b16 %v1216
    %v1894 = vunpack.c.l.b16 %v1217
    %v1895 = vunpack.c.h.b16 %v1217
    %v1896 = vunpack.c.l.b16 %v1218
    %v1897 = vunpack.c.h.b16 %v1218
    %v1898 = vunpack.c.l.b16 %v1219
    %v1899 = vunpack.c.h.b16 %v1219
    %v1900 = vunpack.c.l.b16 %v1220
    %v1901 = vunpack.c.h.b16 %v1220
    %v1902 = vunpack.c.l.b16 %v1221
    %v1903 = vunpack.c.h.b16 %v1221
    %v1904 = vunpack.c.l.b16 %v1222
    %v1905 = vunpack.c.h.b16 %v1222
    %v1906 = vunpack.c.l.b16 %v1223
    %v1907 = vunpack.c.h.b16 %v1223
    %v1908 = vunpack.c.l.b16 %v1224
    %v1909 = vunpack.c.h.b16 %v1224
    %v1910 = vunpack.c.l.b16 %v1225
    %v1911 = vunpack.c.h.b16 %v1225
    %v1912 = vunpack.c.l.b16 %v1226
    %v1913 = vunpack.c.h.b16 %v1226
    %v1914 = vunpack.c.l.b16 %v1227
    %v1915 = vunpack.c.h.b16 %v1227
    %v1916 = vunpack.c.l.b16 %v1228
    %v1917 = vunpack.c.h.b16 %v1228
    %v1918 = vunpack.c.l.b16 %v1229
    %v1919 = vunpack.c.h.b16 %v1229
    %v1920 = vunpack.c.l.b16 %v1230
    %v1921 = vunpack.c.h.b16 %v1230
    %v1922 = vunpack.c.l.b16 %v1231
    %v1923 = vunpack.c.h.b16 %v1231
    %v1924 = vunpack.c.l.b16 %v1232
    %v1925 = vunpack.c.h.b16 %v1232
    %v1926 = vunpack.c.l.b16 %v1233
    %v1927 = vunpack.c.h.b16 %v1233
    %v1928 = vunpack.c.l.b16 %v1234
    %v1929 = vunpack.c.h.b16 %v1234
    %v1930 = vunpack.c.l.b16 %v1235
    %v1931 = vunpack.c.h.b16 %v1235
    %v1932 = vunpack.c.l.b16 %v1236
    %v1933 = vunpack.c.h.b16 %v1236
    %v1934 = vunpack.c.l.b16 %v1237
    %v1935 = vunpack.c.h.b16 %v1237
    %v1936 = vunpack.c.l.b16 %v1238
    %v1937 = vunpack.c.h.b16 %v1238
    %v1938 = vunpack.c.l.b16 %v1239
    %v1939 = vunpack.c.h.b16 %v1239
    %v1940 = vunpack.c.l.b16 %v1240
    %v1941 = vunpack.c.h.b16 %v1240
    %v1942 = vunpack.c.l.b16 %v1241
    %v1943 = vunpack.c.h.b16 %v1241
    %v1944 = vunpack.c.l.b16 %v1242
    %v1945 = vunpack.c.h.b16 %v1242
    %v1946 = vunpack.c.l.b16 %v1243
    %v1947 = vunpack.c.h.b16 %v1243
    %v1948 = vunpack.c.l.b16 %v1244
    %v1949 = vunpack.c.h.b16 %v1244
    %v1950 = vunpack.c.l.b16 %v1245
    %v1951 = vunpack.c.h.b16 %v1245
    %v1952 = vunpack.c.l.b16 %v1246
    %v1953 = vunpack.c.h.b16 %v1246
    %v1954 = vunpack.c.l.b16 %v1247
    %v1955 = vunpack.c.h.b16 %v1247
    %v1956 = vunpack.c.l.b16 %v1248
    %v1957 = vunpack.c.h.b16 %v1248
    %v1958 = vunpack.c.l.b16 %v1249
    %v1959 = vunpack.c.h.b16 %v1249
    %v1960 = vunpack.c.l.b16 %v1250
    %v1961 = vunpack.c.h.b16 %v1250
    %v1962 = vunpack.c.l.b16 %v1251
    %v1963 = vunpack.c.h.b16 %v1251
    %v1964 = vunpack.c.l.b16 %v1252
    %v1965 = vunpack.c.h.b16 %v1252
    %v1966 = vunpack.c.l.b16 %v1253
    %v1967 = vunpack.c.h.b16 %v1253
    %v1968 = vunpack.c.l.b16 %v1254
    %v1969 = vunpack.c.h.b16 %v1254
    %v1970 = vunpack.c.l.b16 %v1255
    %v1971 = vunpack.c.h.b16 %v1255
    %v1972 = vunpack.c.l.b16 %v1256
    %v1973 = vunpack.c.h.b16 %v1256
    %v1974 = vunpack.c.l.b16 %v1257
    %v1975 = vunpack.c.h.b16 %v1257
    %v1976 = vunpack.c.l.b16 %v1258
    %v1977 = vunpack.c.h.b16 %v1258
    %v1978 = vunpack.c.l.b16 %v1259
    %v1979 = vunpack.c.h.b16 %v1259
    %v1980 = vunpack.c.l.b16 %v1260
    %v1981 = vunpack.c.h.b16 %v1260
    %v1982 = vunpack.c.l.b16 %v1261
    %v1983 = vunpack.c.h.b16 %v1261
    %v1984 = vunpack.c.l.b16 %v1262
    %v1985 = vunpack.c.h.b16 %v1262
    %v1986 = vunpack.c.l.b16 %v1263
    %v1987 = vunpack.c.h.b16 %v1263
    %v1988 = vunpack.c.l.b16 %v1264
    %v1989 = vunpack.c.h.b16 %v1264
    %v1990 = vunpack.c.l.b16 %v1265
    %v1991 = vunpack.c.h.b16 %v1265
    %v1992 = vunpack.c.l.b16 %v1266
    %v1993 = vunpack.c.h.b16 %v1266
    %v1994 = vunpack.c.l.b16 %v1267
    %v1995 = vunpack.c.h.b16 %v1267
    %v1996 = vunpack.c.l.b16 %v1268
    %v1997 = vunpack.c.h.b16 %v1268
    %v1998 = vunpack.c.l.b16 %v1269
    %v1999 = vunpack.c.h.b16 %v1269
    %v2000 = vunpack.c.l.b16 %v1270
    %v2001 = vunpack.c.h.b16 %v1270
    %v2002 = vunpack.c.l.b16 %v1271
    %v2003 = vunpack.c.h.b16 %v1271
    %v2004 = vunpack.c.l.b16 %v1272
    %v2005 = vunpack.c.h.b16 %v1272
    %v2006 = vunpack.c.l.b16 %v1273
    %v2007 = vunpack.c.h.b16 %v1273
    %v2008 = vunpack.c.l.b16 %v1274
    %v2009 = vunpack.c.h.b16 %v1274
    %v2010 = vunpack.c.l.b16 %v1275
    %v2011 = vunpack.c.h.b16 %v1275
    %v2012 = vunpack.c.l.b16 %v1276
    %v2013 = vunpack.c.h.b16 %v1276
    %v2014 = vunpack.c.l.b16 %v1277
    %v2015 = vunpack.c.h.b16 %v1277
    %v2016 = vunpack.c.l.b16 %v1278
    %v2017 = vunpack.c.h.b16 %v1278
    %v2018 = vunpack.c.l.b16 %v1279
    %v2019 = vunpack.c.h.b16 %v1279
    %v2020 = vunpack.c.l.b16 %v1280
    %v2021 = vunpack.c.h.b16 %v1280
    %v2022 = vunpack.c.l.b16 %v1281
    %v2023 = vunpack.c.h.b16 %v1281
    %v2024 = vunpack.c.l.b16 %v1282
    %v2025 = vunpack.c.h.b16 %v1282
    %v2026 = vunpack.c.l.b16 %v1283
    %v2027 = vunpack.c.h.b16 %v1283
    %v2028 = vunpack.c.l.b16 %v1284
    %v2029 = vunpack.c.h.b16 %v1284
    %v2030 = vunpack.c.l.b16 %v1285
    %v2031 = vunpack.c.h.b16 %v1285
    %v2032 = vunpack.c.l.b16 %v1286
    %v2033 = vunpack.c.h.b16 %v1286
    %v2034 = vunpack.c.l.b16 %v1287
    %v2035 = vunpack.c.h.b16 %v1287
    %v2036 = vunpack.c.l.b16 %v1288
    %v2037 = vunpack.c.h.b16 %v1288
    %v2038 = vunpack.c.l.b16 %v1289
    %v2039 = vunpack.c.h.b16 %v1289
    %v2040 = vunpack.c.l.b16 %v1290
    %v2041 = vunpack.c.h.b16 %v1290
    %v2042 = vunpack.c.l.b16 %v1291
    %v2043 = vunpack.c.h.b16 %v1291
    %v2044 = vunpack.c.l.b16 %v1292
    %v2045 = vunpack.c.h.b16 %v1292
    %v2046 = vunpack.c.l.b16 %v1293
    %v2047 = vunpack.c.h.b16 %v1293
    %v2048 = vunpack.c.l.b16 %v1294
    %v2049 = vunpack.c.h.b16 %v1294
    %v2050 = vunpack.c.l.b16 %v1295
    %v2051 = vunpack.c.h.b16 %v1295
    %v2052 = vunpack.c.l.b16 %v1296
    %v2053 = vunpack.c.h.b16 %v1296
    %v2054 = vunpack.c.l.b16 %v1297
    %v2055 = vunpack.c.h.b16 %v1297
    %v2056 = vunpack.c.l.b16 %v1298
    %v2057 = vunpack.c.h.b16 %v1298
    %v2058 = vunpack.c.l.b16 %v1299
    %v2059 = vunpack.c.h.b16 %v1299
    %v2060 = vunpack.c.l.b16 %v1300
    %v2061 = vunpack.c.h.b16 %v1300
    %v2062 = vunpack.c.l.b16 %v1301
    %v2063 = vunpack.c.h.b16 %v1301
    %v2064 = vunpack.c.l.b16 %v1302
    %v2065 = vunpack.c.h.b16 %v1302
    %v2066 = vunpack.c.l.b16 %v1303
    %v2067 = vunpack.c.h.b16 %v1303
    %v2068 = vunpack.c.l.b16 %v1304
    %v2069 = vunpack.c.h.b16 %v1304
    %v2070 = vunpack.c.l.b16 %v1305
    %v2071 = vunpack.c.h.b16 %v1305
    %v2072 = vunpack.c.l.b16 %v1306
    %v2073 = vunpack.c.h.b16 %v1306
    %v2074 = vunpack.c.l.b16 %v1307
    %v2075 = vunpack.c.h.b16 %v1307
    %v2076 = vunpack.c.l.b16 %v1308
    %v2077 = vunpack.c.h.b16 %v1308
    %v2078 = vunpack.c.l.b16 %v1309
    %v2079 = vunpack.c.h.b16 %v1309
    %v2080 = vunpack.c.l.b16 %v1310
    %v2081 = vunpack.c.h.b16 %v1310
    %v2082 = vunpack.c.l.b16 %v1311
    %v2083 = vunpack.c.h.b16 %v1311
    %v2084 = vunpack.c.l.b16 %v1312
    %v2085 = vunpack.c.h.b16 %v1312
    %v2086 = vunpack.c.l.b16 %v1313
    %v2087 = vunpack.c.h.b16 %v1313
    %v2088 = vunpack.c.l.b16 %v1314
    %v2089 = vunpack.c.h.b16 %v1314
    %v2090 = vunpack.c.l.b16 %v1315
    %v2091 = vunpack.c.h.b16 %v1315
    %v2092 = vunpack.c.l.b16 %v1316
    %v2093 = vunpack.c.h.b16 %v1316
    %v2094 = vunpack.c.l.b16 %v1317
    %v2095 = vunpack.c.h.b16 %v1317
    %v2096 = vunpack.c.l.b16 %v1318
    %v2097 = vunpack.c.h.b16 %v1318
    %v2098 = vunpack.c.l.b16 %v1319
    %v2099 = vunpack.c.h.b16 %v1319
    %v2100 = vunpack.c.l.b16 %v1320
    %v2101 = vunpack.c.h.b16 %v1320
    %v2102 = vunpack.c.l.b16 %v1321
    %v2103 = vunpack.c.h.b16 %v1321
    %v2104 = vunpack.c.l.b16 %v1322
    %v2105 = vunpack.c.h.b16 %v1322
    %v2106 = vunpack.c.l.b16 %v1323
    %v2107 = vunpack.c.h.b16 %v1323
    %v2108 = vunpack.c.l.b16 %v1324
    %v2109 = vunpack.c.h.b16 %v1324
    %v2110 = vunpack.c.l.b16 %v1325
    %v2111 = vunpack.c.h.b16 %v1325
    %v2112 = vpack.c.b16 %v1608, %v1600
    %v2113 = vpack.c.b16 %v1609, %v1601
    %v2114 = vpack.c.b16 %v1610, %v1602
    %v2115 = vpack.c.b16 %v1611, %v1603
    %v2116 = vpack.c.b16 %v1612, %v1604
    %v2117 = vpack.c.b16 %v1613, %v1605
    %v2118 = vpack.c.b16 %v1614, %v1606
    %v2119 = vpack.c.b16 %v1615, %v1607
    %v2120 = vpack.c.b16 %v1624, %v1616
    %v2121 = vpack.c.b16 %v1625, %v1617
    %v2122 = vpack.c.b16 %v1626, %v1618
    %v2123 = vpack.c.b16 %v1627, %v1619
    %v2124 = vpack.c.b16 %v1628, %v1620
    %v2125 = vpack.c.b16 %v1629, %v1621
    %v2126 = vpack.c.b16 %v1630, %v1622
    %v2127 = vpack.c.b16 %v1631, %v1623
    %v2128 = vpack.c.b16 %v1640, %v1632
    %v2129 = vpack.c.b16 %v1641, %v1633
    %v2130 = vpack.c.b16 %v1642, %v1634
    %v2131 = vpack.c.b16 %v1643, %v1635
    %v2132 = vpack.c.b16 %v1644, %v1636
    %v2133 = vpack.c.b16 %v1645, %v1637
    %v2134 = vpack.c.b16 %v1646, %v1638
    %v2135 = vpack.c.b16 %v1647, %v1639
    %v2136 = vpack.c.b16 %v1656, %v1648
    %v2137 = vpack.c.b16 %v1657, %v1649
    %v2138 = vpack.c.b16 %v1658, %v1650
    %v2139 = vpack.c.b16 %v1659, %v1651
    %v2140 = vpack.c.b16 %v1660, %v1652
    %v2141 = vpack.c.b16 %v1661, %v1653
    %v2142 = vpack.c.b16 %v1662, %v1654
    %v2143 = vpack.c.b16 %v1663, %v1655
    %v2144 = vpack.c.b16 %v1672, %v1664
    %v2145 = vpack.c.b16 %v1673, %v1665
    %v2146 = vpack.c.b16 %v1674, %v1666
    %v2147 = vpack.c.b16 %v1675, %v1667
    %v2148 = vpack.c.b16 %v1676, %v1668
    %v2149 = vpack.c.b16 %v1677, %v1669
    %v2150 = vpack.c.b16 %v1678, %v1670
    %v2151 = vpack.c.b16 %v1679, %v1671
    %v2152 = vpack.c.b16 %v1688, %v1680
    %v2153 = vpack.c.b16 %v1689, %v1681
    %v2154 = vpack.c.b16 %v1690, %v1682
    %v2155 = vpack.c.b16 %v1691, %v1683
    %v2156 = vpack.c.b16 %v1692, %v1684
    %v2157 = vpack.c.b16 %v1693, %v1685
    %v2158 = vpack.c.b16 %v1694, %v1686
    %v2159 = vpack.c.b16 %v1695, %v1687
    %v2160 = vpack.c.b16 %v1704, %v1696
    %v2161 = vpack.c.b16 %v1705, %v1697
    %v2162 = vpack.c.b16 %v1706, %v1698
    %v2163 = vpack.c.b16 %v1707, %v1699
    %v2164 = vpack.c.b16 %v1708, %v1700
    %v2165 = vpack.c.b16 %v1709, %v1701
    %v2166 = vpack.c.b16 %v1710, %v1702
    %v2167 = vpack.c.b16 %v1711, %v1703
    %v2168 = vpack.c.b16 %v1720, %v1712
    %v2169 = vpack.c.b16 %v1721, %v1713
    %v2170 = vpack.c.b16 %v1722, %v1714
    %v2171 = vpack.c.b16 %v1723, %v1715
    %v2172 = vpack.c.b16 %v1724, %v1716
    %v2173 = vpack.c.b16 %v1725, %v1717
    %v2174 = vpack.c.b16 %v1726, %v1718
    %v2175 = vpack.c.b16 %v1727, %v1719
    %v2176 = vpack.c.b16 %v1736, %v1728
    %v2177 = vpack.c.b16 %v1737, %v1729
    %v2178 = vpack.c.b16 %v1738, %v1730
    %v2179 = vpack.c.b16 %v1739, %v1731
    %v2180 = vpack.c.b16 %v1740, %v1732
    %v2181 = vpack.c.b16 %v1741, %v1733
    %v2182 = vpack.c.b16 %v1742, %v1734
    %v2183 = vpack.c.b16 %v1743, %v1735
    %v2184 = vpack.c.b16 %v1752, %v1744
    %v2185 = vpack.c.b16 %v1753, %v1745
    %v2186 = vpack.c.b16 %v1754, %v1746
    %v2187 = vpack.c.b16 %v1755, %v1747
    %v2188 = vpack.c.b16 %v1756, %v1748
    %v2189 = vpack.c.b16 %v1757, %v1749
    %v2190 = vpack.c.b16 %v1758, %v1750
    %v2191 = vpack.c.b16 %v1759, %v1751
    %v2192 = vpack.c.b16 %v1768, %v1760
    %v2193 = vpack.c.b16 %v1769, %v1761
    %v2194 = vpack.c.b16 %v1770, %v1762
    %v2195 = vpack.c.b16 %v1771, %v1763
    %v2196 = vpack.c.b16 %v1772, %v1764
    %v2197 = vpack.c.b16 %v1773, %v1765
    %v2198 = vpack.c.b16 %v1774, %v1766
    %v2199 = vpack.c.b16 %v1775, %v1767
    %v2200 = vpack.c.b16 %v1784, %v1776
    %v2201 = vpack.c.b16 %v1785, %v1777
    %v2202 = vpack.c.b16 %v1786, %v1778
    %v2203 = vpack.c.b16 %v1787, %v1779
    %v2204 = vpack.c.b16 %v1788, %v1780
    %v2205 = vpack.c.b16 %v1789, %v1781
    %v2206 = vpack.c.b16 %v1790, %v1782
    %v2207 = vpack.c.b16 %v1791, %v1783
    %v2208 = vpack.c.b16 %v1800, %v1792
    %v2209 = vpack.c.b16 %v1801, %v1793
    %v2210 = vpack.c.b16 %v1802, %v1794
    %v2211 = vpack.c.b16 %v1803, %v1795
    %v2212 = vpack.c.b16 %v1804, %v1796
    %v2213 = vpack.c.b16 %v1805, %v1797
    %v2214 = vpack.c.b16 %v1806, %v1798
    %v2215 = vpack.c.b16 %v1807, %v1799
    %v2216 = vpack.c.b16 %v1816, %v1808
    %v2217 = vpack.c.b16 %v1817, %v1809
    %v2218 = vpack.c.b16 %v1818, %v1810
    %v2219 = vpack.c.b16 %v1819, %v1811
    %v2220 = vpack.c.b16 %v1820, %v1812
    %v2221 = vpack.c.b16 %v1821, %v1813
    %v2222 = vpack.c.b16 %v1822, %v1814
    %v2223 = vpack.c.b16 %v1823, %v1815
    %v2224 = vpack.c.b16 %v1832, %v1824
    %v2225 = vpack.c.b16 %v1833, %v1825
    %v2226 = vpack.c.b16 %v1834, %v1826
    %v2227 = vpack.c.b16 %v1835, %v1827
    %v2228 = vpack.c.b16 %v1836, %v1828
    %v2229 = vpack.c.b16 %v1837, %v1829
    %v2230 = vpack.c.b16 %v1838, %v1830
    %v2231 = vpack.c.b16 %v1839, %v1831
    %v2232 = vpack.c.b16 %v1848, %v1840
    %v2233 = vpack.c.b16 %v1849, %v1841
    %v2234 = vpack.c.b16 %v1850, %v1842
    %v2235 = vpack.c.b16 %v1851, %v1843
    %v2236 = vpack.c.b16 %v1852, %v1844
    %v2237 = vpack.c.b16 %v1853, %v1845
    %v2238 = vpack.c.b16 %v1854, %v1846
    %v2239 = vpack.c.b16 %v1855, %v1847
    %v2240 = vpack.c.b16 %v1864, %v1856
    %v2241 = vpack.c.b16 %v1865, %v1857
    %v2242 = vpack.c.b16 %v1866, %v1858
    %v2243 = vpack.c.b16 %v1867, %v1859
    %v2244 = vpack.c.b16 %v1868, %v1860
    %v2245 = vpack.c.b16 %v1869, %v1861
    %v2246 = vpack.c.b16 %v1870, %v1862
    %v2247 = vpack.c.b16 %v1871, %v1863
    %v2248 = vpack.c.b16 %v1880, %v1872
    %v2249 = vpack.c.b16 %v1881, %v1873
    %v2250 = vpack.c.b16 %v1882, %v1874
    %v2251 = vpack.c.b16 %v1883, %v1875
    %v2252 = vpack.c.b16 %v1884, %v1876
    %v2253 = vpack.c.b16 %v1885, %v1877
    %v2254 = vpack.c.b16 %v1886, %v1878
    %v2255 = vpack.c.b16 %v1887, %v1879
    %v2256 = vpack.c.b16 %v1896, %v1888
    %v2257 = vpack.c.b16 %v1897, %v1889
    %v2258 = vpack.c.b16 %v1898, %v1890
    %v2259 = vpack.c.b16 %v1899, %v1891
    %v2260 = vpack.c.b16 %v1900, %v1892
    %v2261 = vpack.c.b16 %v1901, %v1893
    %v2262 = vpack.c.b16 %v1902, %v1894
    %v2263 = vpack.c.b16 %v1903, %v1895
    %v2264 = vpack.c.b16 %v1912, %v1904
    %v2265 = vpack.c.b16 %v1913, %v1905
    %v2266 = vpack.c.b16 %v1914, %v1906
    %v2267 = vpack.c.b16 %v1915, %v1907
    %v2268 = vpack.c.b16 %v1916, %v1908
    %v2269 = vpack.c.b16 %v1917, %v1909
    %v2270 = vpack.c.b16 %v1918, %v1910
    %v2271 = vpack.c.b16 %v1919, %v1911
    %v2272 = vpack.c.b16 %v1928, %v1920
    %v2273 = vpack.c.b16 %v1929, %v1921
    %v2274 = vpack.c.b16 %v1930, %v1922
    %v2275 = vpack.c.b16 %v1931, %v1923
    %v2276 = vpack.c.b16 %v1932, %v1924
    %v2277 = vpack.c.b16 %v1933, %v1925
    %v2278 = vpack.c.b16 %v1934, %v1926
    %v2279 = vpack.c.b16 %v1935, %v1927
    %v2280 = vpack.c.b16 %v1944, %v1936
    %v2281 = vpack.c.b16 %v1945, %v1937
    %v2282 = vpack.c.b16 %v1946, %v1938
    %v2283 = vpack.c.b16 %v1947, %v1939
    %v2284 = vpack.c.b16 %v1948, %v1940
    %v2285 = vpack.c.b16 %v1949, %v1941
    %v2286 = vpack.c.b16 %v1950, %v1942
    %v2287 = vpack.c.b16 %v1951, %v1943
    %v2288 = vpack.c.b16 %v1960, %v1952
    %v2289 = vpack.c.b16 %v1961, %v1953
    %v2290 = vpack.c.b16 %v1962, %v1954
    %v2291 = vpack.c.b16 %v1963, %v1955
    %v2292 = vpack.c.b16 %v1964, %v1956
    %v2293 = vpack.c.b16 %v1965, %v1957
    %v2294 = vpack.c.b16 %v1966, %v1958
    %v2295 = vpack.c.b16 %v1967, %v1959
    %v2296 = vpack.c.b16 %v1976, %v1968
    %v2297 = vpack.c.b16 %v1977, %v1969
    %v2298 = vpack.c.b16 %v1978, %v1970
    %v2299 = vpack.c.b16 %v1979, %v1971
    %v2300 = vpack.c.b16 %v1980, %v1972
    %v2301 = vpack.c.b16 %v1981, %v1973
    %v2302 = vpack.c.b16 %v1982, %v1974
    %v2303 = vpack.c.b16 %v1983, %v1975
    %v2304 = vpack.c.b16 %v1992, %v1984
    %v2305 = vpack.c.b16 %v1993, %v1985
    %v2306 = vpack.c.b16 %v1994, %v1986
    %v2307 = vpack.c.b16 %v1995, %v1987
    %v2308 = vpack.c.b16 %v1996, %v1988
    %v2309 = vpack.c.b16 %v1997, %v1989
    %v2310 = vpack.c.b16 %v1998, %v1990
    %v2311 = vpack.c.b16 %v1999, %v1991
    %v2312 = vpack.c.b16 %v2008, %v2000
    %v2313 = vpack.c.b16 %v2009, %v2001
    %v2314 = vpack.c.b16 %v2010, %v2002
    %v2315 = vpack.c.b16 %v2011, %v2003
    %v2316 = vpack.c.b16 %v2012, %v2004
    %v2317 = vpack.c.b16 %v2013, %v2005
    %v2318 = vpack.c.b16 %v2014, %v2006
    %v2319 = vpack.c.b16 %v2015, %v2007
    %v2320 = vpack.c.b16 %v2024, %v2016
    %v2321 = vpack.c.b16 %v2025, %v2017
    %v2322 = vpack.c.b16 %v2026, %v2018
    %v2323 = vpack.c.b16 %v2027, %v2019
    %v2324 = vpack.c.b16 %v2028, %v2020
    %v2325 = vpack.c.b16 %v2029, %v2021
    %v2326 = vpack.c.b16 %v2030, %v2022
    %v2327 = vpack.c.b16 %v2031, %v2023
    %v2328 = vpack.c.b16 %v2040, %v2032
    %v2329 = vpack.c.b16 %v2041, %v2033
    %v2330 = vpack.c.b16 %v2042, %v2034
    %v2331 = vpack.c.b16 %v2043, %v2035
    %v2332 = vpack.c.b16 %v2044, %v2036
    %v2333 = vpack.c.b16 %v2045, %v2037
    %v2334 = vpack.c.b16 %v2046, %v2038
    %v2335 = vpack.c.b16 %v2047, %v2039
    %v2336 = vpack.c.b16 %v2056, %v2048
    %v2337 = vpack.c.b16 %v2057, %v2049
    %v2338 = vpack.c.b16 %v2058, %v2050
    %v2339 = vpack.c.b16 %v2059, %v2051
    %v2340 = vpack.c.b16 %v2060, %v2052
    %v2341 = vpack.c.b16 %v2061, %v2053
    %v2342 = vpack.c.b16 %v2062, %v2054
    %v2343 = vpack.c.b16 %v2063, %v2055
    %v2344 = vpack.c.b16 %v2072, %v2064
    %v2345 = vpack.c.b16 %v2073, %v2065
    %v2346 = vpack.c.b16 %v2074, %v2066
    %v2347 = vpack.c.b16 %v2075, %v2067
    %v2348 = vpack.c.b16 %v2076, %v2068
    %v2349 = vpack.c.b16 %v2077, %v2069
    %v2350 = vpack.c.b16 %v2078, %v2070
    %v2351 = vpack.c.b16 %v2079, %v2071
    %v2352 = vpack.c.b16 %v2088, %v2080
    %v2353 = vpack.c.b16 %v2089, %v2081
    %v2354 = vpack.c.b16 %v2090, %v2082
    %v2355 = vpack.c.b16 %v2091, %v2083
    %v2356 = vpack.c.b16 %v2092, %v2084
    %v2357 = vpack.c.b16 %v2093, %v2085
    %v2358 = vpack.c.b16 %v2094, %v2086
    %v2359 = vpack.c.b16 %v2095, %v2087
    %v2360 = vpack.c.b16 %v2104, %v2096
    %v2361 = vpack.c.b16 %v2105, %v2097
    %v2362 = vpack.c.b16 %v2106, %v2098
    %v2363 = vpack.c.b16 %v2107, %v2099
    %v2364 = vpack.c.b16 %v2108, %v2100
    %v2365 = vpack.c.b16 %v2109, %v2101
    %v2366 = vpack.c.b16 %v2110, %v2102
    %v2367 = vpack.c.b16 %v2111, %v2103
    %2624 = vmatpush.bf16.msra.mxu0 %v2168
    %2625 = vmatpush.bf16.msra.mxu0 %v2160
    %2626 = vmatpush.bf16.msra.mxu0 %v2152
    %2627 = vmatpush.bf16.msra.mxu0 %v2144
    %2628 = vmatpush.bf16.msra.mxu0 %v2136
    %2629 = vmatpush.bf16.msra.mxu0 %v2128
    %2630 = vmatpush.bf16.msra.mxu0 %v2120
    %2631 = vmatpush.bf16.msra.mxu0 %v2112
    %2632 = vmatmul.bf16.gmra.mxu0 %v1066
    %v2633 = vpop.f32.mrf.mxu0
    %v2634 = vadd.f32 %v1328, %v2633
    %v2635 = vpop.f32.mrf.mxu0
    %2636 = vdwg.mxu0
    %2637 = vmatpush.bf16.msra.mxu0 %v2232
    %2638 = vmatpush.bf16.msra.mxu0 %v2224
    %2639 = vmatpush.bf16.msra.mxu0 %v2216
    %2640 = vmatpush.bf16.msra.mxu0 %v2208
    %2641 = vmatpush.bf16.msra.mxu0 %v2200
    %2642 = vmatpush.bf16.msra.mxu0 %v2192
    %2643 = vmatpush.bf16.msra.mxu0 %v2184
    %2644 = vmatpush.bf16.msra.mxu0 %v2176
    %2645 = vmatmul.bf16.gmra.mxu0 %v1067
    %v2646 = vpop.f32.mrf.mxu0
    %v2647 = vadd.f32 %v2634, %v2646
    %v2648 = vpop.f32.mrf.mxu0
    %2649 = vdwg.mxu0
    %2650 = vmatpush.bf16.msra.mxu0 %v2296
    %2651 = vmatpush.bf16.msra.mxu0 %v2288
    %2652 = vmatpush.bf16.msra.mxu0 %v2280
    %2653 = vmatpush.bf16.msra.mxu0 %v2272
    %2654 = vmatpush.bf16.msra.mxu0 %v2264
    %2655 = vmatpush.bf16.msra.mxu0 %v2256
    %2656 = vmatpush.bf16.msra.mxu0 %v2248
    %2657 = vmatpush.bf16.msra.mxu0 %v2240
    %2658 = vmatmul.bf16.gmra.mxu0 %v1068
    %v2659 = vpop.f32.mrf.mxu0
    %v2660 = vadd.f32 %v2647, %v2659
    %v2661 = vpop.f32.mrf.mxu0
    %2662 = vdwg.mxu0
    %2663 = vmatpush.bf16.msra.mxu0 %v2360
    %2664 = vmatpush.bf16.msra.mxu0 %v2352
    %2665 = vmatpush.bf16.msra.mxu0 %v2344
    %2666 = vmatpush.bf16.msra.mxu0 %v2336
    %2667 = vmatpush.bf16.msra.mxu0 %v2328
    %2668 = vmatpush.bf16.msra.mxu0 %v2320
    %2669 = vmatpush.bf16.msra.mxu0 %v2312
    %2670 = vmatpush.bf16.msra.mxu0 %v2304
    %2671 = vmatmul.bf16.gmra.mxu0 %v1069
    %v2672 = vpop.f32.mrf.mxu0
    %v2673 = vadd.f32 %v2660, %v2672
    %v2674 = vpop.f32.mrf.mxu0
    %2675 = vdwg.mxu0
    %2676 = vmatpush.bf16.msra.mxu0 %v2169
    %2677 = vmatpush.bf16.msra.mxu0 %v2161
    %2678 = vmatpush.bf16.msra.mxu0 %v2153
    %2679 = vmatpush.bf16.msra.mxu0 %v2145
    %2680 = vmatpush.bf16.msra.mxu0 %v2137
    %2681 = vmatpush.bf16.msra.mxu0 %v2129
    %2682 = vmatpush.bf16.msra.mxu0 %v2121
    %2683 = vmatpush.bf16.msra.mxu0 %v2113
    %2684 = vmatmul.bf16.gmra.mxu0 %v1066
    %v2685 = vpop.f32.mrf.mxu0
    %v2686 = vadd.f32 %v1329, %v2685
    %v2687 = vpop.f32.mrf.mxu0
    %2688 = vdwg.mxu0
    %2689 = vmatpush.bf16.msra.mxu0 %v2233
    %2690 = vmatpush.bf16.msra.mxu0 %v2225
    %2691 = vmatpush.bf16.msra.mxu0 %v2217
    %2692 = vmatpush.bf16.msra.mxu0 %v2209
    %2693 = vmatpush.bf16.msra.mxu0 %v2201
    %2694 = vmatpush.bf16.msra.mxu0 %v2193
    %2695 = vmatpush.bf16.msra.mxu0 %v2185
    %2696 = vmatpush.bf16.msra.mxu0 %v2177
    %2697 = vmatmul.bf16.gmra.mxu0 %v1067
    %v2698 = vpop.f32.mrf.mxu0
    %v2699 = vadd.f32 %v2686, %v2698
    %v2700 = vpop.f32.mrf.mxu0
    %2701 = vdwg.mxu0
    %2702 = vmatpush.bf16.msra.mxu0 %v2297
    %2703 = vmatpush.bf16.msra.mxu0 %v2289
    %2704 = vmatpush.bf16.msra.mxu0 %v2281
    %2705 = vmatpush.bf16.msra.mxu0 %v2273
    %2706 = vmatpush.bf16.msra.mxu0 %v2265
    %2707 = vmatpush.bf16.msra.mxu0 %v2257
    %2708 = vmatpush.bf16.msra.mxu0 %v2249
    %2709 = vmatpush.bf16.msra.mxu0 %v2241
    %2710 = vmatmul.bf16.gmra.mxu0 %v1068
    %v2711 = vpop.f32.mrf.mxu0
    %v2712 = vadd.f32 %v2699, %v2711
    %v2713 = vpop.f32.mrf.mxu0
    %2714 = vdwg.mxu0
    %2715 = vmatpush.bf16.msra.mxu0 %v2361
    %2716 = vmatpush.bf16.msra.mxu0 %v2353
    %2717 = vmatpush.bf16.msra.mxu0 %v2345
    %2718 = vmatpush.bf16.msra.mxu0 %v2337
    %2719 = vmatpush.bf16.msra.mxu0 %v2329
    %2720 = vmatpush.bf16.msra.mxu0 %v2321
    %2721 = vmatpush.bf16.msra.mxu0 %v2313
    %2722 = vmatpush.bf16.msra.mxu0 %v2305
    %2723 = vmatmul.bf16.gmra.mxu0 %v1069
    %v2724 = vpop.f32.mrf.mxu0
    %v2725 = vadd.f32 %v2712, %v2724
    %v2726 = vpop.f32.mrf.mxu0
    %2727 = vdwg.mxu0
    %2728 = vmatpush.bf16.msra.mxu0 %v2170
    %2729 = vmatpush.bf16.msra.mxu0 %v2162
    %2730 = vmatpush.bf16.msra.mxu0 %v2154
    %2731 = vmatpush.bf16.msra.mxu0 %v2146
    %2732 = vmatpush.bf16.msra.mxu0 %v2138
    %2733 = vmatpush.bf16.msra.mxu0 %v2130
    %2734 = vmatpush.bf16.msra.mxu0 %v2122
    %2735 = vmatpush.bf16.msra.mxu0 %v2114
    %2736 = vmatmul.bf16.gmra.mxu0 %v1066
    %v2737 = vpop.f32.mrf.mxu0
    %v2738 = vadd.f32 %v1330, %v2737
    %v2739 = vpop.f32.mrf.mxu0
    %2740 = vdwg.mxu0
    %2741 = vmatpush.bf16.msra.mxu0 %v2234
    %2742 = vmatpush.bf16.msra.mxu0 %v2226
    %2743 = vmatpush.bf16.msra.mxu0 %v2218
    %2744 = vmatpush.bf16.msra.mxu0 %v2210
    %2745 = vmatpush.bf16.msra.mxu0 %v2202
    %2746 = vmatpush.bf16.msra.mxu0 %v2194
    %2747 = vmatpush.bf16.msra.mxu0 %v2186
    %2748 = vmatpush.bf16.msra.mxu0 %v2178
    %2749 = vmatmul.bf16.gmra.mxu0 %v1067
    %v2750 = vpop.f32.mrf.mxu0
    %v2751 = vadd.f32 %v2738, %v2750
    %v2752 = vpop.f32.mrf.mxu0
    %2753 = vdwg.mxu0
    %2754 = vmatpush.bf16.msra.mxu0 %v2298
    %2755 = vmatpush.bf16.msra.mxu0 %v2290
    %2756 = vmatpush.bf16.msra.mxu0 %v2282
    %2757 = vmatpush.bf16.msra.mxu0 %v2274
    %2758 = vmatpush.bf16.msra.mxu0 %v2266
    %2759 = vmatpush.bf16.msra.mxu0 %v2258
    %2760 = vmatpush.bf16.msra.mxu0 %v2250
    %2761 = vmatpush.bf16.msra.mxu0 %v2242
    %2762 = vmatmul.bf16.gmra.mxu0 %v1068
    %v2763 = vpop.f32.mrf.mxu0
    %v2764 = vadd.f32 %v2751, %v2763
    %v2765 = vpop.f32.mrf.mxu0
    %2766 = vdwg.mxu0
    %2767 = vmatpush.bf16.msra.mxu0 %v2362
    %2768 = vmatpush.bf16.msra.mxu0 %v2354
    %2769 = vmatpush.bf16.msra.mxu0 %v2346
    %2770 = vmatpush.bf16.msra.mxu0 %v2338
    %2771 = vmatpush.bf16.msra.mxu0 %v2330
    %2772 = vmatpush.bf16.msra.mxu0 %v2322
    %2773 = vmatpush.bf16.msra.mxu0 %v2314
    %2774 = vmatpush.bf16.msra.mxu0 %v2306
    %2775 = vmatmul.bf16.gmra.mxu0 %v1069
    %v2776 = vpop.f32.mrf.mxu0
    %v2777 = vadd.f32 %v2764, %v2776
    %v2778 = vpop.f32.mrf.mxu0
    %2779 = vdwg.mxu0
    %2780 = vmatpush.bf16.msra.mxu0 %v2171
    %2781 = vmatpush.bf16.msra.mxu0 %v2163
    %2782 = vmatpush.bf16.msra.mxu0 %v2155
    %2783 = vmatpush.bf16.msra.mxu0 %v2147
    %2784 = vmatpush.bf16.msra.mxu0 %v2139
    %2785 = vmatpush.bf16.msra.mxu0 %v2131
    %2786 = vmatpush.bf16.msra.mxu0 %v2123
    %2787 = vmatpush.bf16.msra.mxu0 %v2115
    %2788 = vmatmul.bf16.gmra.mxu0 %v1066
    %v2789 = vpop.f32.mrf.mxu0
    %v2790 = vadd.f32 %v1331, %v2789
    %v2791 = vpop.f32.mrf.mxu0
    %2792 = vdwg.mxu0
    %2793 = vmatpush.bf16.msra.mxu0 %v2235
    %2794 = vmatpush.bf16.msra.mxu0 %v2227
    %2795 = vmatpush.bf16.msra.mxu0 %v2219
    %2796 = vmatpush.bf16.msra.mxu0 %v2211
    %2797 = vmatpush.bf16.msra.mxu0 %v2203
    %2798 = vmatpush.bf16.msra.mxu0 %v2195
    %2799 = vmatpush.bf16.msra.mxu0 %v2187
    %2800 = vmatpush.bf16.msra.mxu0 %v2179
    %2801 = vmatmul.bf16.gmra.mxu0 %v1067
    %v2802 = vpop.f32.mrf.mxu0
    %v2803 = vadd.f32 %v2790, %v2802
    %v2804 = vpop.f32.mrf.mxu0
    %2805 = vdwg.mxu0
    %2806 = vmatpush.bf16.msra.mxu0 %v2299
    %2807 = vmatpush.bf16.msra.mxu0 %v2291
    %2808 = vmatpush.bf16.msra.mxu0 %v2283
    %2809 = vmatpush.bf16.msra.mxu0 %v2275
    %2810 = vmatpush.bf16.msra.mxu0 %v2267
    %2811 = vmatpush.bf16.msra.mxu0 %v2259
    %2812 = vmatpush.bf16.msra.mxu0 %v2251
    %2813 = vmatpush.bf16.msra.mxu0 %v2243
    %2814 = vmatmul.bf16.gmra.mxu0 %v1068
    %v2815 = vpop.f32.mrf.mxu0
    %v2816 = vadd.f32 %v2803, %v2815
    %v2817 = vpop.f32.mrf.mxu0
    %2818 = vdwg.mxu0
    %2819 = vmatpush.bf16.msra.mxu0 %v2363
    %2820 = vmatpush.bf16.msra.mxu0 %v2355
    %2821 = vmatpush.bf16.msra.mxu0 %v2347
    %2822 = vmatpush.bf16.msra.mxu0 %v2339
    %2823 = vmatpush.bf16.msra.mxu0 %v2331
    %2824 = vmatpush.bf16.msra.mxu0 %v2323
    %2825 = vmatpush.bf16.msra.mxu0 %v2315
    %2826 = vmatpush.bf16.msra.mxu0 %v2307
    %2827 = vmatmul.bf16.gmra.mxu0 %v1069
    %v2828 = vpop.f32.mrf.mxu0
    %v2829 = vadd.f32 %v2816, %v2828
    %v2830 = vpop.f32.mrf.mxu0
    %2831 = vdwg.mxu0
    %2832 = vmatpush.bf16.msra.mxu0 %v2172
    %2833 = vmatpush.bf16.msra.mxu0 %v2164
    %2834 = vmatpush.bf16.msra.mxu0 %v2156
    %2835 = vmatpush.bf16.msra.mxu0 %v2148
    %2836 = vmatpush.bf16.msra.mxu0 %v2140
    %2837 = vmatpush.bf16.msra.mxu0 %v2132
    %2838 = vmatpush.bf16.msra.mxu0 %v2124
    %2839 = vmatpush.bf16.msra.mxu0 %v2116
    %2840 = vmatmul.bf16.gmra.mxu0 %v1066
    %v2841 = vpop.f32.mrf.mxu0
    %v2842 = vadd.f32 %v1332, %v2841
    %v2843 = vpop.f32.mrf.mxu0
    %2844 = vdwg.mxu0
    %2845 = vmatpush.bf16.msra.mxu0 %v2236
    %2846 = vmatpush.bf16.msra.mxu0 %v2228
    %2847 = vmatpush.bf16.msra.mxu0 %v2220
    %2848 = vmatpush.bf16.msra.mxu0 %v2212
    %2849 = vmatpush.bf16.msra.mxu0 %v2204
    %2850 = vmatpush.bf16.msra.mxu0 %v2196
    %2851 = vmatpush.bf16.msra.mxu0 %v2188
    %2852 = vmatpush.bf16.msra.mxu0 %v2180
    %2853 = vmatmul.bf16.gmra.mxu0 %v1067
    %v2854 = vpop.f32.mrf.mxu0
    %v2855 = vadd.f32 %v2842, %v2854
    %v2856 = vpop.f32.mrf.mxu0
    %2857 = vdwg.mxu0
    %2858 = vmatpush.bf16.msra.mxu0 %v2300
    %2859 = vmatpush.bf16.msra.mxu0 %v2292
    %2860 = vmatpush.bf16.msra.mxu0 %v2284
    %2861 = vmatpush.bf16.msra.mxu0 %v2276
    %2862 = vmatpush.bf16.msra.mxu0 %v2268
    %2863 = vmatpush.bf16.msra.mxu0 %v2260
    %2864 = vmatpush.bf16.msra.mxu0 %v2252
    %2865 = vmatpush.bf16.msra.mxu0 %v2244
    %2866 = vmatmul.bf16.gmra.mxu0 %v1068
    %v2867 = vpop.f32.mrf.mxu0
    %v2868 = vadd.f32 %v2855, %v2867
    %v2869 = vpop.f32.mrf.mxu0
    %2870 = vdwg.mxu0
    %2871 = vmatpush.bf16.msra.mxu0 %v2364
    %2872 = vmatpush.bf16.msra.mxu0 %v2356
    %2873 = vmatpush.bf16.msra.mxu0 %v2348
    %2874 = vmatpush.bf16.msra.mxu0 %v2340
    %2875 = vmatpush.bf16.msra.mxu0 %v2332
    %2876 = vmatpush.bf16.msra.mxu0 %v2324
    %2877 = vmatpush.bf16.msra.mxu0 %v2316
    %2878 = vmatpush.bf16.msra.mxu0 %v2308
    %2879 = vmatmul.bf16.gmra.mxu0 %v1069
    %v2880 = vpop.f32.mrf.mxu0
    %v2881 = vadd.f32 %v2868, %v2880
    %v2882 = vpop.f32.mrf.mxu0
    %2883 = vdwg.mxu0
    %2884 = vmatpush.bf16.msra.mxu0 %v2173
    %2885 = vmatpush.bf16.msra.mxu0 %v2165
    %2886 = vmatpush.bf16.msra.mxu0 %v2157
    %2887 = vmatpush.bf16.msra.mxu0 %v2149
    %2888 = vmatpush.bf16.msra.mxu0 %v2141
    %2889 = vmatpush.bf16.msra.mxu0 %v2133
    %2890 = vmatpush.bf16.msra.mxu0 %v2125
    %2891 = vmatpush.bf16.msra.mxu0 %v2117
    %2892 = vmatmul.bf16.gmra.mxu0 %v1066
    %v2893 = vpop.f32.mrf.mxu0
    %v2894 = vadd.f32 %v1333, %v2893
    %v2895 = vpop.f32.mrf.mxu0
    %2896 = vdwg.mxu0
    %2897 = vmatpush.bf16.msra.mxu0 %v2237
    %2898 = vmatpush.bf16.msra.mxu0 %v2229
    %2899 = vmatpush.bf16.msra.mxu0 %v2221
    %2900 = vmatpush.bf16.msra.mxu0 %v2213
    %2901 = vmatpush.bf16.msra.mxu0 %v2205
    %2902 = vmatpush.bf16.msra.mxu0 %v2197
    %2903 = vmatpush.bf16.msra.mxu0 %v2189
    %2904 = vmatpush.bf16.msra.mxu0 %v2181
    %2905 = vmatmul.bf16.gmra.mxu0 %v1067
    %v2906 = vpop.f32.mrf.mxu0
    %v2907 = vadd.f32 %v2894, %v2906
    %v2908 = vpop.f32.mrf.mxu0
    %2909 = vdwg.mxu0
    %2910 = vmatpush.bf16.msra.mxu0 %v2301
    %2911 = vmatpush.bf16.msra.mxu0 %v2293
    %2912 = vmatpush.bf16.msra.mxu0 %v2285
    %2913 = vmatpush.bf16.msra.mxu0 %v2277
    %2914 = vmatpush.bf16.msra.mxu0 %v2269
    %2915 = vmatpush.bf16.msra.mxu0 %v2261
    %2916 = vmatpush.bf16.msra.mxu0 %v2253
    %2917 = vmatpush.bf16.msra.mxu0 %v2245
    %2918 = vmatmul.bf16.gmra.mxu0 %v1068
    %v2919 = vpop.f32.mrf.mxu0
    %v2920 = vadd.f32 %v2907, %v2919
    %v2921 = vpop.f32.mrf.mxu0
    %2922 = vdwg.mxu0
    %2923 = vmatpush.bf16.msra.mxu0 %v2365
    %2924 = vmatpush.bf16.msra.mxu0 %v2357
    %2925 = vmatpush.bf16.msra.mxu0 %v2349
    %2926 = vmatpush.bf16.msra.mxu0 %v2341
    %2927 = vmatpush.bf16.msra.mxu0 %v2333
    %2928 = vmatpush.bf16.msra.mxu0 %v2325
    %2929 = vmatpush.bf16.msra.mxu0 %v2317
    %2930 = vmatpush.bf16.msra.mxu0 %v2309
    %2931 = vmatmul.bf16.gmra.mxu0 %v1069
    %v2932 = vpop.f32.mrf.mxu0
    %v2933 = vadd.f32 %v2920, %v2932
    %v2934 = vpop.f32.mrf.mxu0
    %2935 = vdwg.mxu0
    %2936 = vmatpush.bf16.msra.mxu0 %v2174
    %2937 = vmatpush.bf16.msra.mxu0 %v2166
    %2938 = vmatpush.bf16.msra.mxu0 %v2158
    %2939 = vmatpush.bf16.msra.mxu0 %v2150
    %2940 = vmatpush.bf16.msra.mxu0 %v2142
    %2941 = vmatpush.bf16.msra.mxu0 %v2134
    %2942 = vmatpush.bf16.msra.mxu0 %v2126
    %2943 = vmatpush.bf16.msra.mxu0 %v2118
    %2944 = vmatmul.bf16.gmra.mxu0 %v1066
    %v2945 = vpop.f32.mrf.mxu0
    %v2946 = vadd.f32 %v1334, %v2945
    %v2947 = vpop.f32.mrf.mxu0
    %2948 = vdwg.mxu0
    %2949 = vmatpush.bf16.msra.mxu0 %v2238
    %2950 = vmatpush.bf16.msra.mxu0 %v2230
    %2951 = vmatpush.bf16.msra.mxu0 %v2222
    %2952 = vmatpush.bf16.msra.mxu0 %v2214
    %2953 = vmatpush.bf16.msra.mxu0 %v2206
    %2954 = vmatpush.bf16.msra.mxu0 %v2198
    %2955 = vmatpush.bf16.msra.mxu0 %v2190
    %2956 = vmatpush.bf16.msra.mxu0 %v2182
    %2957 = vmatmul.bf16.gmra.mxu0 %v1067
    %v2958 = vpop.f32.mrf.mxu0
    %v2959 = vadd.f32 %v2946, %v2958
    %v2960 = vpop.f32.mrf.mxu0
    %2961 = vdwg.mxu0
    %2962 = vmatpush.bf16.msra.mxu0 %v2302
    %2963 = vmatpush.bf16.msra.mxu0 %v2294
    %2964 = vmatpush.bf16.msra.mxu0 %v2286
    %2965 = vmatpush.bf16.msra.mxu0 %v2278
    %2966 = vmatpush.bf16.msra.mxu0 %v2270
    %2967 = vmatpush.bf16.msra.mxu0 %v2262
    %2968 = vmatpush.bf16.msra.mxu0 %v2254
    %2969 = vmatpush.bf16.msra.mxu0 %v2246
    %2970 = vmatmul.bf16.gmra.mxu0 %v1068
    %v2971 = vpop.f32.mrf.mxu0
    %v2972 = vadd.f32 %v2959, %v2971
    %v2973 = vpop.f32.mrf.mxu0
    %2974 = vdwg.mxu0
    %2975 = vmatpush.bf16.msra.mxu0 %v2366
    %2976 = vmatpush.bf16.msra.mxu0 %v2358
    %2977 = vmatpush.bf16.msra.mxu0 %v2350
    %2978 = vmatpush.bf16.msra.mxu0 %v2342
    %2979 = vmatpush.bf16.msra.mxu0 %v2334
    %2980 = vmatpush.bf16.msra.mxu0 %v2326
    %2981 = vmatpush.bf16.msra.mxu0 %v2318
    %2982 = vmatpush.bf16.msra.mxu0 %v2310
    %2983 = vmatmul.bf16.gmra.mxu0 %v1069
    %v2984 = vpop.f32.mrf.mxu0
    %v2985 = vadd.f32 %v2972, %v2984
    %v2986 = vpop.f32.mrf.mxu0
    %2987 = vdwg.mxu0
    %2988 = vmatpush.bf16.msra.mxu0 %v2175
    %2989 = vmatpush.bf16.msra.mxu0 %v2167
    %2990 = vmatpush.bf16.msra.mxu0 %v2159
    %2991 = vmatpush.bf16.msra.mxu0 %v2151
    %2992 = vmatpush.bf16.msra.mxu0 %v2143
    %2993 = vmatpush.bf16.msra.mxu0 %v2135
    %2994 = vmatpush.bf16.msra.mxu0 %v2127
    %2995 = vmatpush.bf16.msra.mxu0 %v2119
    %2996 = vmatmul.bf16.gmra.mxu0 %v1066
    %v2997 = vpop.f32.mrf.mxu0
    %v2998 = vadd.f32 %v1335, %v2997
    %v2999 = vpop.f32.mrf.mxu0
    %3000 = vdwg.mxu0
    %3001 = vmatpush.bf16.msra.mxu0 %v2239
    %3002 = vmatpush.bf16.msra.mxu0 %v2231
    %3003 = vmatpush.bf16.msra.mxu0 %v2223
    %3004 = vmatpush.bf16.msra.mxu0 %v2215
    %3005 = vmatpush.bf16.msra.mxu0 %v2207
    %3006 = vmatpush.bf16.msra.mxu0 %v2199
    %3007 = vmatpush.bf16.msra.mxu0 %v2191
    %3008 = vmatpush.bf16.msra.mxu0 %v2183
    %3009 = vmatmul.bf16.gmra.mxu0 %v1067
    %v3010 = vpop.f32.mrf.mxu0
    %v3011 = vadd.f32 %v2998, %v3010
    %v3012 = vpop.f32.mrf.mxu0
    %3013 = vdwg.mxu0
    %3014 = vmatpush.bf16.msra.mxu0 %v2303
    %3015 = vmatpush.bf16.msra.mxu0 %v2295
    %3016 = vmatpush.bf16.msra.mxu0 %v2287
    %3017 = vmatpush.bf16.msra.mxu0 %v2279
    %3018 = vmatpush.bf16.msra.mxu0 %v2271
    %3019 = vmatpush.bf16.msra.mxu0 %v2263
    %3020 = vmatpush.bf16.msra.mxu0 %v2255
    %3021 = vmatpush.bf16.msra.mxu0 %v2247
    %3022 = vmatmul.bf16.gmra.mxu0 %v1068
    %v3023 = vpop.f32.mrf.mxu0
    %v3024 = vadd.f32 %v3011, %v3023
    %v3025 = vpop.f32.mrf.mxu0
    %3026 = vdwg.mxu0
    %3027 = vmatpush.bf16.msra.mxu0 %v2367
    %3028 = vmatpush.bf16.msra.mxu0 %v2359
    %3029 = vmatpush.bf16.msra.mxu0 %v2351
    %3030 = vmatpush.bf16.msra.mxu0 %v2343
    %3031 = vmatpush.bf16.msra.mxu0 %v2335
    %3032 = vmatpush.bf16.msra.mxu0 %v2327
    %3033 = vmatpush.bf16.msra.mxu0 %v2319
    %3034 = vmatpush.bf16.msra.mxu0 %v2311
    %3035 = vmatmul.bf16.gmra.mxu0 %v1069
    %v3036 = vpop.f32.mrf.mxu0
    %v3037 = vadd.f32 %v3024, %v3036
    %v3038 = vpop.f32.mrf.mxu0
    %3039 = vdwg.mxu0
    %v3040 = vld [vmem:[#allocation11 + $0x15] sm:$0xff]
    %v3041 = vld [vmem:[#allocation11 + $0x23] sm:$0xff]
    %v3042 = vrot.slane %v2673, 4
    %v3043 = vadd.f32 %v2673, %v3042
    %v3044 = vrot.slane %v3043, 2
    %v3045 = vadd.f32 %v3043, %v3044
    %v3046 = vrot.slane %v3045, 1
    %v3047 = vadd.f32 %v3045, %v3046
    %v3048 = vrot.slane %v2725, 4
    %v3049 = vadd.f32 %v2725, %v3048
    %v3050 = vrot.slane %v3049, 2
    %v3051 = vadd.f32 %v3049, %v3050
    %v3052 = vrot.slane %v3051, 1
    %v3053 = vadd.f32 %v3051, %v3052
    %v3054 = vrot.slane %v2777, 4
    %v3055 = vadd.f32 %v2777, %v3054
    %v3056 = vrot.slane %v3055, 2
    %v3057 = vadd.f32 %v3055, %v3056
    %v3058 = vrot.slane %v3057, 1
    %v3059 = vadd.f32 %v3057, %v3058
    %v3060 = vrot.slane %v2829, 4
    %v3061 = vadd.f32 %v2829, %v3060
    %v3062 = vrot.slane %v3061, 2
    %v3063 = vadd.f32 %v3061, %v3062
    %v3064 = vrot.slane %v3063, 1
    %v3065 = vadd.f32 %v3063, %v3064
    %v3066 = vrot.slane %v2881, 4
    %v3067 = vadd.f32 %v2881, %v3066
    %v3068 = vrot.slane %v3067, 2
    %v3069 = vadd.f32 %v3067, %v3068
    %v3070 = vrot.slane %v3069, 1
    %v3071 = vadd.f32 %v3069, %v3070
    %v3072 = vrot.slane %v2933, 4
    %v3073 = vadd.f32 %v2933, %v3072
    %v3074 = vrot.slane %v3073, 2
    %v3075 = vadd.f32 %v3073, %v3074
    %v3076 = vrot.slane %v3075, 1
    %v3077 = vadd.f32 %v3075, %v3076
    %v3078 = vrot.slane %v2985, 4
    %v3079 = vadd.f32 %v2985, %v3078
    %v3080 = vrot.slane %v3079, 2
    %v3081 = vadd.f32 %v3079, %v3080
    %v3082 = vrot.slane %v3081, 1
    %v3083 = vadd.f32 %v3081, %v3082
    %v3084 = vrot.slane %v3037, 4
    %v3085 = vadd.f32 %v3037, %v3084
    %v3086 = vrot.slane %v3085, 2
    %v3087 = vadd.f32 %v3085, %v3086
    %v3088 = vrot.slane %v3087, 1
    %v3089 = vadd.f32 %v3087, %v3088
    %v3090 = vmul.f32 %v3047, %v349
    %v3091 = vmul.f32 %v3053, %v349
    %v3092 = vmul.f32 %v3059, %v349
    %v3093 = vmul.f32 %v3065, %v349
    %v3094 = vmul.f32 %v3071, %v349
    %v3095 = vmul.f32 %v3077, %v349
    %v3096 = vmul.f32 %v3083, %v349
    %v3097 = vmul.f32 %v3089, %v349
    %v3098 = vsub.f32 %v2673, %v3090
    %v3099 = vsub.f32 %v2725, %v3091
    %v3100 = vsub.f32 %v2777, %v3092
    %v3101 = vsub.f32 %v2829, %v3093
    %v3102 = vsub.f32 %v2881, %v3094
    %v3103 = vsub.f32 %v2933, %v3095
    %v3104 = vsub.f32 %v2985, %v3096
    %v3105 = vsub.f32 %v3037, %v3097
    %v3106 = vmul.f32 %v3098, %v3098
    %v3107 = vmul.f32 %v3099, %v3099
    %v3108 = vmul.f32 %v3100, %v3100
    %v3109 = vmul.f32 %v3101, %v3101
    %v3110 = vmul.f32 %v3102, %v3102
    %v3111 = vmul.f32 %v3103, %v3103
    %v3112 = vmul.f32 %v3104, %v3104
    %v3113 = vmul.f32 %v3105, %v3105
    %v3114 = vrot.slane %v3106, 4
    %v3115 = vadd.f32 %v3106, %v3114
    %v3116 = vrot.slane %v3115, 2
    %v3117 = vadd.f32 %v3115, %v3116
    %v3118 = vrot.slane %v3117, 1
    %v3119 = vadd.f32 %v3117, %v3118
    %v3120 = vrot.slane %v3107, 4
    %v3121 = vadd.f32 %v3107, %v3120
    %v3122 = vrot.slane %v3121, 2
    %v3123 = vadd.f32 %v3121, %v3122
    %v3124 = vrot.slane %v3123, 1
    %v3125 = vadd.f32 %v3123, %v3124
    %v3126 = vrot.slane %v3108, 4
    %v3127 = vadd.f32 %v3108, %v3126
    %v3128 = vrot.slane %v3127, 2
    %v3129 = vadd.f32 %v3127, %v3128
    %v3130 = vrot.slane %v3129, 1
    %v3131 = vadd.f32 %v3129, %v3130
    %v3132 = vrot.slane %v3109, 4
    %v3133 = vadd.f32 %v3109, %v3132
    %v3134 = vrot.slane %v3133, 2
    %v3135 = vadd.f32 %v3133, %v3134
    %v3136 = vrot.slane %v3135, 1
    %v3137 = vadd.f32 %v3135, %v3136
    %v3138 = vrot.slane %v3110, 4
    %v3139 = vadd.f32 %v3110, %v3138
    %v3140 = vrot.slane %v3139, 2
    %v3141 = vadd.f32 %v3139, %v3140
    %v3142 = vrot.slane %v3141, 1
    %v3143 = vadd.f32 %v3141, %v3142
    %v3144 = vrot.slane %v3111, 4
    %v3145 = vadd.f32 %v3111, %v3144
    %v3146 = vrot.slane %v3145, 2
    %v3147 = vadd.f32 %v3145, %v3146
    %v3148 = vrot.slane %v3147, 1
    %v3149 = vadd.f32 %v3147, %v3148
    %v3150 = vrot.slane %v3112, 4
    %v3151 = vadd.f32 %v3112, %v3150
    %v3152 = vrot.slane %v3151, 2
    %v3153 = vadd.f32 %v3151, %v3152
    %v3154 = vrot.slane %v3153, 1
    %v3155 = vadd.f32 %v3153, %v3154
    %v3156 = vrot.slane %v3113, 4
    %v3157 = vadd.f32 %v3113, %v3156
    %v3158 = vrot.slane %v3157, 2
    %v3159 = vadd.f32 %v3157, %v3158
    %v3160 = vrot.slane %v3159, 1
    %v3161 = vadd.f32 %v3159, %v3160
    %v3162 = vmul.f32 %v3119, %v349
    %v3163 = vmul.f32 %v3125, %v349
    %v3164 = vmul.f32 %v3131, %v349
    %v3165 = vmul.f32 %v3137, %v349
    %v3166 = vmul.f32 %v3143, %v349
    %v3167 = vmul.f32 %v3149, %v349
    %v3168 = vmul.f32 %v3155, %v349
    %v3169 = vmul.f32 %v3161, %v349
    %v3171 = vperm.slane %v3040, 0
    %v3172 = vperm.slane %v3040, 1
    %v3173 = vperm.slane %v3040, 2
    %v3174 = vperm.slane %v3040, 3
    %v3175 = vperm.slane %v3040, 4
    %v3176 = vperm.slane %v3040, 5
    %v3177 = vperm.slane %v3040, 6
    %v3178 = vperm.slane %v3040, 7
    %v3187 = vmul.f32 %v3171, %v3098
    %v3188 = vmul.f32 %v3172, %v3099
    %v3189 = vmul.f32 %v3173, %v3100
    %v3190 = vmul.f32 %v3174, %v3101
    %v3191 = vmul.f32 %v3175, %v3102
    %v3192 = vmul.f32 %v3176, %v3103
    %v3193 = vmul.f32 %v3177, %v3104
    %v3194 = vmul.f32 %v3178, %v3105
    %v3195 = vadd.f32 %v3162, 1e-05
    %v3196 = vadd.f32 %v3163, 1e-05
    %v3197 = vadd.f32 %v3164, 1e-05
    %v3198 = vadd.f32 %v3165, 1e-05
    %v3199 = vadd.f32 %v3166, 1e-05
    %v3200 = vadd.f32 %v3167, 1e-05
    %v3201 = vadd.f32 %v3168, 1e-05
    %v3202 = vadd.f32 %v3169, 1e-05
    %v3203 = vrsqrt.pop %v3195
    %v3204 = vmul.f32 %v3203, %v3195
    %v3205 = vmul.f32 %v3204, %v3203
    %v3206 = vmul.f32 0.5, %v3205
    %v3207 = vsub.f32 1.5, %v3206
    %v3208 = vmul.f32 %v3203, %v3207
    %vm3209 = vweird.f32 %v3195
    %vm3210 = vweird.f32 %v3203
    %vm3211 = vmor %vm3209, %vm3210
    %v3212 = vsel %vm3211, %v3203, %v3208
    %v3213 = vrsqrt.pop %v3196
    %v3214 = vmul.f32 %v3213, %v3196
    %v3215 = vmul.f32 %v3214, %v3213
    %v3216 = vmul.f32 0.5, %v3215
    %v3217 = vsub.f32 1.5, %v3216
    %v3218 = vmul.f32 %v3213, %v3217
    %vm3219 = vweird.f32 %v3196
    %vm3220 = vweird.f32 %v3213
    %vm3221 = vmor %vm3219, %vm3220
    %v3222 = vsel %vm3221, %v3213, %v3218
    %v3223 = vrsqrt.pop %v3197
    %v3224 = vmul.f32 %v3223, %v3197
    %v3225 = vmul.f32 %v3224, %v3223
    %v3226 = vmul.f32 0.5, %v3225
    %v3227 = vsub.f32 1.5, %v3226
    %v3228 = vmul.f32 %v3223, %v3227
    %vm3229 = vweird.f32 %v3197
    %vm3230 = vweird.f32 %v3223
    %vm3231 = vmor %vm3229, %vm3230
    %v3232 = vsel %vm3231, %v3223, %v3228
    %v3233 = vrsqrt.pop %v3198
    %v3234 = vmul.f32 %v3233, %v3198
    %v3235 = vmul.f32 %v3234, %v3233
    %v3236 = vmul.f32 0.5, %v3235
    %v3237 = vsub.f32 1.5, %v3236
    %v3238 = vmul.f32 %v3233, %v3237
    %vm3239 = vweird.f32 %v3198
    %vm3240 = vweird.f32 %v3233
    %vm3241 = vmor %vm3239, %vm3240
    %v3242 = vsel %vm3241, %v3233, %v3238
    %v3243 = vrsqrt.pop %v3199
    %v3244 = vmul.f32 %v3243, %v3199
    %v3245 = vmul.f32 %v3244, %v3243
    %v3246 = vmul.f32 0.5, %v3245
    %v3247 = vsub.f32 1.5, %v3246
    %v3248 = vmul.f32 %v3243, %v3247
    %vm3249 = vweird.f32 %v3199
    %vm3250 = vweird.f32 %v3243
    %vm3251 = vmor %vm3249, %vm3250
    %v3252 = vsel %vm3251, %v3243, %v3248
    %v3253 = vrsqrt.pop %v3200
    %v3254 = vmul.f32 %v3253, %v3200
    %v3255 = vmul.f32 %v3254, %v3253
    %v3256 = vmul.f32 0.5, %v3255
    %v3257 = vsub.f32 1.5, %v3256
    %v3258 = vmul.f32 %v3253, %v3257
    %vm3259 = vweird.f32 %v3200
    %vm3260 = vweird.f32 %v3253
    %vm3261 = vmor %vm3259, %vm3260
    %v3262 = vsel %vm3261, %v3253, %v3258
    %v3263 = vrsqrt.pop %v3201
    %v3264 = vmul.f32 %v3263, %v3201
    %v3265 = vmul.f32 %v3264, %v3263
    %v3266 = vmul.f32 0.5, %v3265
    %v3267 = vsub.f32 1.5, %v3266
    %v3268 = vmul.f32 %v3263, %v3267
    %vm3269 = vweird.f32 %v3201
    %vm3270 = vweird.f32 %v3263
    %vm3271 = vmor %vm3269, %vm3270
    %v3272 = vsel %vm3271, %v3263, %v3268
    %v3273 = vrsqrt.pop %v3202
    %v3274 = vmul.f32 %v3273, %v3202
    %v3275 = vmul.f32 %v3274, %v3273
    %v3276 = vmul.f32 0.5, %v3275
    %v3277 = vsub.f32 1.5, %v3276
    %v3278 = vmul.f32 %v3273, %v3277
    %vm3279 = vweird.f32 %v3202
    %vm3280 = vweird.f32 %v3273
    %vm3281 = vmor %vm3279, %vm3280
    %v3282 = vsel %vm3281, %v3273, %v3278
    %v3283 = vmul.f32 %v3187, %v3212
    %v3284 = vmul.f32 %v3188, %v3222
    %v3285 = vmul.f32 %v3189, %v3232
    %v3286 = vmul.f32 %v3190, %v3242
    %v3287 = vmul.f32 %v3191, %v3252
    %v3288 = vmul.f32 %v3192, %v3262
    %v3289 = vmul.f32 %v3193, %v3272
    %v3290 = vmul.f32 %v3194, %v3282
    %v3292 = vperm.slane %v3041, 0
    %v3293 = vperm.slane %v3041, 1
    %v3294 = vperm.slane %v3041, 2
    %v3295 = vperm.slane %v3041, 3
    %v3296 = vperm.slane %v3041, 4
    %v3297 = vperm.slane %v3041, 5
    %v3298 = vperm.slane %v3041, 6
    %v3299 = vperm.slane %v3041, 7
    %v3308 = vadd.f32 %v3283, %v3292
    %v3309 = vadd.f32 %v3284, %v3293
    %v3310 = vadd.f32 %v3285, %v3294
    %v3311 = vadd.f32 %v3286, %v3295
    %v3312 = vadd.f32 %v3287, %v3296
    %v3313 = vadd.f32 %v3288, %v3297
    %v3314 = vadd.f32 %v3289, %v3298
    %v3315 = vadd.f32 %v3290, %v3299
    %vm3316 = vcmp.gt.f32.partialorder %v3308, 0.0
    %vm3317 = vcmp.gt.f32.partialorder %v3309, 0.0
    %vm3318 = vcmp.gt.f32.partialorder %v3310, 0.0
    %vm3319 = vcmp.gt.f32.partialorder %v3311, 0.0
    %vm3320 = vcmp.gt.f32.partialorder %v3312, 0.0
    %vm3321 = vcmp.gt.f32.partialorder %v3313, 0.0
    %vm3322 = vcmp.gt.f32.partialorder %v3314, 0.0
    %vm3323 = vcmp.gt.f32.partialorder %v3315, 0.0
    %v3324 = vmul.f32 %v3308, 0.2
    %v3325 = vmul.f32 %v3309, 0.2
    %v3326 = vmul.f32 %v3310, 0.2
    %v3327 = vmul.f32 %v3311, 0.2
    %v3328 = vmul.f32 %v3312, 0.2
    %v3329 = vmul.f32 %v3313, 0.2
    %v3330 = vmul.f32 %v3314, 0.2
    %v3331 = vmul.f32 %v3315, 0.2
    %v3332 = vsel %vm3316, %v3308, %v3324
    %v3333 = vsel %vm3317, %v3309, %v3325
    %v3334 = vsel %vm3318, %v3310, %v3326
    %v3335 = vsel %vm3319, %v3311, %v3327
    %v3336 = vsel %vm3320, %v3312, %v3328
    %v3337 = vsel %vm3321, %v3313, %v3329
    %v3338 = vsel %vm3322, %v3314, %v3330
    %v3339 = vsel %vm3323, %v3315, %v3331
    %3340 = vst [vmem:[#allocation13] sm:$0xff] %v3332
    %3341 = vst [vmem:[#allocation13 + $0x8] sm:$0xff] %v3333
    %3342 = vst [vmem:[#allocation13 + $0x10] sm:$0xff] %v3334
    %3343 = vst [vmem:[#allocation13 + $0x18] sm:$0xff] %v3335
    %3344 = vst [vmem:[#allocation13 + $0x20] sm:$0xff] %v3336
    %3345 = vst [vmem:[#allocation13 + $0x28] sm:$0xff] %v3337
    %3346 = vst [vmem:[#allocation13 + $0x30] sm:$0xff] %v3338
    %3347 = vst [vmem:[#allocation13 + $0x38] sm:$0xff] %v3339
    // Predicated region
    $region50: #{tpu_custom_call.1} parent=1 // pred_check
      _
    $region51: #{tpu_custom_call.1} parent=1 // pred_check_branch
      %3349 = sbr.rel (0) target = $region53
    $region52: #{tpu_custom_call.1} parent=1 // pred_region
      %3351 = vsyncadd [#allocation4], 0
      %s3353 = sshll.u32 [#allocation13], 4
      %s3354 = int_to_ptr.vmem [resolvable:$true] %s3353
      %s3355 = sshll.u32 %s6, 4
      %s3356 = int_to_ptr.hbm [resolvable:$true] %s3355
      %3358 = dma.vmem_to_hbm [thread:$0]  %s3354, 1024, %s3356, [#allocation4]
    $region53: #{tpu_custom_call.1} parent=1 // pred_fallthru
      _
    // Predicated region
    $region54: #{tpu_custom_call.1} parent=1 // pred_check
      _
    $region55: #{tpu_custom_call.1} parent=1 // pred_check_branch
      %3360 = sbr.rel (0) target = $region57
    $region56: #{tpu_custom_call.1} parent=1 // pred_region
      %3362 = dma.done [#allocation4], 1024
    $region57: #{tpu_custom_call.1} parent=1 // pred_fallthru
      _
    %3363 = vsyncpa [#allocation3], 1
    %3364 = vsyncpa [#allocation6], 1
    %3365 = vsyncpa [#allocation9], 1
    %3366 = vsyncpa [#allocation12], 1
    %3367 = vsyncpa [#allocation4], 1

</llo_original>
